<compile_context>
chip_gen: v7x
topology: tpu7x:2x2x1
jax: 0.10.0
libtpu: 0.0.40
codegen_flags: <defaults>
</compile_context>

<pallas_src>
import functools
import math

import jax
import jax.numpy as jnp
from jax import lax
from jax.experimental import pallas as pl
from jax.experimental.pallas import tpu as pltpu

D_MODEL = 256
NUM_HEADS = 2  # the module hard-codes 2 heads in nn.MultiheadAttention (num_heads=4 arg unused)


# ----------------------------- kernel -------------------------------------- #

def imu_encoder_kernel(x_ref, query_ref,
                       w_q_ref, b_q_ref,
                       w_kv_ref, b_kv_ref,
                       w_o_ref, b_o_ref,
                       out_ref, attn_w_ref, *, num_heads):
    """Fused single-query multi-head attention for one batch element."""
    x = x_ref[0].astype(jnp.float32)                    # [L, D]
    L, D = x.shape
    hd = D // num_heads
    scale = 1.0 / math.sqrt(hd)

    # --- input projections (q from the learned query; K|V fused into one matmul) ---
    q = jnp.dot(query_ref[...].astype(jnp.float32), w_q_ref[...],
                preferred_element_type=jnp.float32) + b_q_ref[...]          # [1, D]
    kv = jnp.dot(x, w_kv_ref[...],
                 preferred_element_type=jnp.float32) + b_kv_ref[...]        # [L, 2D]
    k = kv[:, :D]                                                           # [L, D]
    v = kv[:, D:]                                                           # [L, D]

    # --- per-head attention (head_dim = 128 -> lane-aligned static slices) ---
    head_outs = []
    head_probs = []
    for h in range(num_heads):
        sl = slice(h * hd, (h + 1) * hd)
        q_h = q[:, sl]                                                      # [1, hd]
        k_h = k[:, sl]                                                      # [L, hd]
        v_h = v[:, sl]                                                      # [L, hd]
        # scores = q_h @ k_h^T  (contract on head dim, no explicit transpose)
        s = lax.dot_general(q_h, k_h, (((1,), (1,)), ((), ())),
                            preferred_element_type=jnp.float32) * scale     # [1, L]
        s = s - jnp.max(s, axis=-1, keepdims=True)                          # XLU (free slot)
        e = jnp.exp(s)                                                      # EUP (free slot)
        inv = pl.reciprocal(jnp.sum(e, axis=-1, keepdims=True), approx=False)
        p = e * inv                                                         # [1, L]
        head_probs.append(p)
        head_outs.append(jnp.dot(p, v_h,
                                 preferred_element_type=jnp.float32))       # [1, hd]

    attn = jnp.concatenate(head_outs, axis=-1)                              # [1, D]
    out = jnp.dot(attn, w_o_ref[...],
                  preferred_element_type=jnp.float32) + b_o_ref[...]        # [1, D]

    p_sum = head_probs[0]
    for p in head_probs[1:]:
        p_sum = p_sum + p
    p_avg = p_sum * (1.0 / num_heads)                                       # [1, L]

    out_ref[0] = out.astype(out_ref.dtype)
    attn_w_ref[0] = p_avg.astype(attn_w_ref.dtype)


# ----------------------------- wrapper -------------------------------------- #

def imu_encoder(x, params, *, num_heads=NUM_HEADS):
    B, L, D = x.shape
    assert D % num_heads == 0
    assert D % 128 == 0 and L % 8 == 0, "shapes must satisfy TPU (8,128) tiling"

    in_specs = [
        pl.BlockSpec((1, L, D), lambda b: (b, 0, 0)),        # x: one batch row per step
        pl.BlockSpec((1, D), lambda b: (0, 0)),              # query     (VMEM-resident)
        pl.BlockSpec((D, D), lambda b: (0, 0)),              # w_q
        pl.BlockSpec((1, D), lambda b: (0, 0)),              # b_q
        pl.BlockSpec((D, 2 * D), lambda b: (0, 0)),          # w_kv (fused K|V proj)
        pl.BlockSpec((1, 2 * D), lambda b: (0, 0)),          # b_kv
        pl.BlockSpec((D, D), lambda b: (0, 0)),              # w_o
        pl.BlockSpec((1, D), lambda b: (0, 0)),              # b_o
    ]
    out_specs = (
        pl.BlockSpec((1, 1, D), lambda b: (b, 0, 0)),        # attn_output
        pl.BlockSpec((1, 1, L), lambda b: (b, 0, 0)),        # attn_output_weights
    )
    out_shape = (
        jax.ShapeDtypeStruct((B, 1, D), jnp.float32),
        jax.ShapeDtypeStruct((B, 1, L), jnp.float32),
    )

    return pl.pallas_call(
        functools.partial(imu_encoder_kernel, num_heads=num_heads),
        grid=(B,),
        in_specs=in_specs,
        out_specs=out_specs,
        out_shape=out_shape,
        compiler_params=pltpu.CompilerParams(
            dimension_semantics=("parallel",)),
    )(x, params["query"], params["w_q"], params["b_q"],
      params["w_kv"], params["b_kv"], params["w_o"], params["b_o"])


# ----------------------------- params -------------------------------------- #

def init_params(key, d_model=D_MODEL):
    kq, k1, k2, k3, k4, k5, k6 = jax.random.split(key, 7)
    bound = 1.0 / math.sqrt(d_model)
    u = lambda k, shape: jax.random.uniform(k, shape, jnp.float32, -bound, bound)
    return {
        "query": jax.random.normal(kq, (1, d_model), jnp.float32),   # nn.Parameter randn
        "w_q":  u(k1, (d_model, d_model)),        # stored transposed: y = x @ W + b
        "b_q":  u(k2, (1, d_model)),
        "w_kv": u(k3, (d_model, 2 * d_model)),    # [Wk^T | Wv^T] concatenated on d_out
        "b_kv": u(k4, (1, 2 * d_model)),
        "w_o":  u(k5, (d_model, d_model)),
        "b_o":  u(k6, (1, d_model)),
    }


# --------------------------- pure-JAX reference ----------------------------- #

def ref_imu_encoder(x, params, *, num_heads=NUM_HEADS):
    B, L, D = x.shape
    hd = D // num_heads
    hi = jax.lax.Precision.HIGHEST

    q = jnp.dot(params["query"], params["w_q"], precision=hi) + params["b_q"]       # [1, D]
    k = jnp.dot(x, params["w_kv"][:, :D], precision=hi) + params["b_kv"][:, :D]     # [B, L, D]
    v = jnp.dot(x, params["w_kv"][:, D:], precision=hi) + params["b_kv"][:, D:]     # [B, L, D]

    q_h = q.reshape(1, num_heads, hd)                                               # [1, H, hd]
    k_h = k.reshape(B, L, num_heads, hd)
    v_h = v.reshape(B, L, num_heads, hd)

    s = jnp.einsum("qhd,blhd->bhql", q_h, k_h, precision=hi) / jnp.sqrt(hd)         # [B, H, 1, L]
    p = jax.nn.softmax(s, axis=-1)
    o = jnp.einsum("bhql,blhd->bqhd", p, v_h, precision=hi).reshape(B, 1, D)
    out = jnp.dot(o, params["w_o"], precision=hi) + params["b_o"]                   # [B, 1, D]
    w_avg = p.mean(axis=1)                                                          # [B, 1, L]
    return out, w_avg


# ------------------------------- main --------------------------------------- #

if __name__ == "__main__":
    B, L, D = 2, 128, D_MODEL          # small batch/seq; d_model fixed by the module (256)

    key = jax.random.PRNGKey(0)
    kx, kp = jax.random.split(key)
    x = jax.random.normal(kx, (B, L, D), jnp.float32)
    params = init_params(kp, D)

    fwd = jax.jit(functools.partial(imu_encoder, num_heads=NUM_HEADS))
    attn_out, attn_w = jax.block_until_ready(fwd(x, params))

    ref_out, ref_w = ref_imu_encoder(x, params, num_heads=NUM_HEADS)

    assert attn_out.shape == (B, 1, D), attn_out.shape
    assert attn_w.shape == (B, 1, L), attn_w.shape
    err_out = float(jnp.max(jnp.abs(attn_out - ref_out)))
    err_w = float(jnp.max(jnp.abs(attn_w - ref_w)))
    assert err_out < 1e-3, f"attn_output max abs err {err_out}"
    assert err_w < 1e-3, f"attn_weights max abs err {err_w}"
    # attention weights of each row sum to ~1
    row_sum_err = float(jnp.max(jnp.abs(jnp.sum(attn_w, axis=-1) - 1.0)))
    assert row_sum_err < 1e-4, f"attn_weights row-sum err {row_sum_err}"
    print("KERNEL_OK")
</pallas_src>

<mosaic_0001>
module attributes {stable_mosaic.version = 11 : i64} {
  func.func @imu_encoder_kernel(%arg0: i32, %arg1: memref<1x128x256xf32, #tpu.memory_space<vmem>>, %arg2: memref<1x256xf32, #tpu.memory_space<vmem>>, %arg3: memref<256x256xf32, #tpu.memory_space<vmem>>, %arg4: memref<1x256xf32, #tpu.memory_space<vmem>>, %arg5: memref<256x512xf32, #tpu.memory_space<vmem>>, %arg6: memref<1x512xf32, #tpu.memory_space<vmem>>, %arg7: memref<256x256xf32, #tpu.memory_space<vmem>>, %arg8: memref<1x256xf32, #tpu.memory_space<vmem>>, %arg9: memref<1x1x256xf32, #tpu.memory_space<vmem>>, %arg10: memref<1x1x128xf32, #tpu.memory_space<vmem>>) attributes {dimension_semantics = [#tpu.dimension_semantics<parallel>], iteration_bounds = array<i64: 2>, scalar_prefetch = 0 : i64, scratch_operands = 0 : i64, tpu.core_type = #tpu.core_type<tc>, window_params = [{transform_indices = @transform_0, window_bounds = array<i64: 1, 128, 256>}, {pipeline_mode = #tpu.pipeline_mode<synchronous>, transform_indices = @transform_1, window_bounds = array<i64: 1, 256>}, {pipeline_mode = #tpu.pipeline_mode<synchronous>, transform_indices = @transform_2, window_bounds = array<i64: 256, 256>}, {pipeline_mode = #tpu.pipeline_mode<synchronous>, transform_indices = @transform_3, window_bounds = array<i64: 1, 256>}, {pipeline_mode = #tpu.pipeline_mode<synchronous>, transform_indices = @transform_4, window_bounds = array<i64: 256, 512>}, {pipeline_mode = #tpu.pipeline_mode<synchronous>, transform_indices = @transform_5, window_bounds = array<i64: 1, 512>}, {pipeline_mode = #tpu.pipeline_mode<synchronous>, transform_indices = @transform_6, window_bounds = array<i64: 256, 256>}, {pipeline_mode = #tpu.pipeline_mode<synchronous>, transform_indices = @transform_7, window_bounds = array<i64: 1, 256>}, {transform_indices = @transform_8, window_bounds = array<i64: 1, 1, 256>}, {transform_indices = @transform_9, window_bounds = array<i64: 1, 1, 128>}]} {
    %c0 = arith.constant 0 : index
    %c0_0 = arith.constant 0 : index
    %c0_1 = arith.constant 0 : index
    %0 = vector.load %arg1[%c0, %c0_0, %c0_1] : memref<1x128x256xf32, #tpu.memory_space<vmem>>, vector<1x128x256xf32>
    %1 = vector.shape_cast %0 : vector<1x128x256xf32> to vector<128x256xf32>
    %c0_2 = arith.constant 0 : index
    %c0_3 = arith.constant 0 : index
    %2 = vector.load %arg2[%c0_2, %c0_3] : memref<1x256xf32, #tpu.memory_space<vmem>>, vector<1x256xf32>
    %c0_4 = arith.constant 0 : index
    %c0_5 = arith.constant 0 : index
    %3 = vector.load %arg3[%c0_4, %c0_5] : memref<256x256xf32, #tpu.memory_space<vmem>>, vector<256x256xf32>
    %cst = arith.constant dense<0.000000e+00> : vector<1x256xf32>
    %4 = tpu.matmul %2, %3, %cst {dimension_numbers = #tpu.dot_dimension_numbers<[1], [0], [0], [1], [0, 0, 1, 1], [], []>} : vector<1x256xf32>, vector<256x256xf32>, vector<1x256xf32> -> vector<1x256xf32>
    %c0_6 = arith.constant 0 : index
    %c0_7 = arith.constant 0 : index
    %5 = vector.load %arg4[%c0_6, %c0_7] : memref<1x256xf32, #tpu.memory_space<vmem>>, vector<1x256xf32>
    %6 = arith.addf %4, %5 : vector<1x256xf32>
    %c0_8 = arith.constant 0 : index
    %c0_9 = arith.constant 0 : index
    %7 = vector.load %arg5[%c0_8, %c0_9] : memref<256x512xf32, #tpu.memory_space<vmem>>, vector<256x512xf32>
    %cst_10 = arith.constant dense<0.000000e+00> : vector<128x512xf32>
    %8 = tpu.matmul %1, %7, %cst_10 {dimension_numbers = #tpu.dot_dimension_numbers<[1], [0], [0], [1], [0, 0, 1, 1], [], []>} : vector<128x256xf32>, vector<256x512xf32>, vector<128x512xf32> -> vector<128x512xf32>
    %c0_11 = arith.constant 0 : index
    %c0_12 = arith.constant 0 : index
    %9 = vector.load %arg6[%c0_11, %c0_12] : memref<1x512xf32, #tpu.memory_space<vmem>>, vector<1x512xf32>
    %10 = vector.broadcast %9 : vector<1x512xf32> to vector<128x512xf32>
    %11 = arith.addf %8, %10 : vector<128x512xf32>
    %12 = vector.extract_strided_slice %11 {offsets = [0, 0], sizes = [128, 256], strides = [1, 1]} : vector<128x512xf32> to vector<128x256xf32>
    %13 = vector.extract_strided_slice %11 {offsets = [0, 256], sizes = [128, 256], strides = [1, 1]} : vector<128x512xf32> to vector<128x256xf32>
    %14 = vector.extract_strided_slice %6 {offsets = [0, 0], sizes = [1, 128], strides = [1, 1]} : vector<1x256xf32> to vector<1x128xf32>
    %15 = vector.extract_strided_slice %12 {offsets = [0, 0], sizes = [128, 128], strides = [1, 1]} : vector<128x256xf32> to vector<128x128xf32>
    %16 = vector.extract_strided_slice %13 {offsets = [0, 0], sizes = [128, 128], strides = [1, 1]} : vector<128x256xf32> to vector<128x128xf32>
    %cst_13 = arith.constant dense<0.000000e+00> : vector<1x128xf32>
    %17 = tpu.matmul %14, %15, %cst_13 {dimension_numbers = #tpu.dot_dimension_numbers<[1], [1], [0], [0], [0, 0, 1, 0], [], []>} : vector<1x128xf32>, vector<128x128xf32>, vector<1x128xf32> -> vector<1x128xf32>
    %cst_14 = arith.constant 0.0883883461 : f32
    %18 = vector.broadcast %cst_14 : f32 to vector<1x128xf32>
    %19 = arith.mulf %17, %18 : vector<1x128xf32>
    %cst_15 = arith.constant dense<0xFF800000> : vector<1xf32>
    %20 = vector.multi_reduction <maximumf>, %19, %cst_15 [1] : vector<1x128xf32> to vector<1xf32>
    %21 = vector.shape_cast %20 : vector<1xf32> to vector<1x1xf32>
    %22 = vector.broadcast %21 : vector<1x1xf32> to vector<1x128xf32>
    %23 = arith.subf %19, %22 : vector<1x128xf32>
    %24 = math.exp %23 : vector<1x128xf32>
    %cst_16 = arith.constant dense<0.000000e+00> : vector<1xf32>
    %25 = vector.multi_reduction <add>, %24, %cst_16 [1] : vector<1x128xf32> to vector<1xf32>
    %26 = vector.shape_cast %25 : vector<1xf32> to vector<1x1xf32>
    %27 = tpu.reciprocal %26 : vector<1x1xf32> -> vector<1x1xf32>
    %28 = vector.broadcast %27 : vector<1x1xf32> to vector<1x128xf32>
    %29 = arith.mulf %24, %28 : vector<1x128xf32>
    %cst_17 = arith.constant dense<0.000000e+00> : vector<1x128xf32>
    %30 = tpu.matmul %29, %16, %cst_17 {dimension_numbers = #tpu.dot_dimension_numbers<[1], [0], [0], [1], [0, 0, 1, 1], [], []>} : vector<1x128xf32>, vector<128x128xf32>, vector<1x128xf32> -> vector<1x128xf32>
    %31 = vector.extract_strided_slice %6 {offsets = [0, 128], sizes = [1, 128], strides = [1, 1]} : vector<1x256xf32> to vector<1x128xf32>
    %32 = vector.extract_strided_slice %12 {offsets = [0, 128], sizes = [128, 128], strides = [1, 1]} : vector<128x256xf32> to vector<128x128xf32>
    %33 = vector.extract_strided_slice %13 {offsets = [0, 128], sizes = [128, 128], strides = [1, 1]} : vector<128x256xf32> to vector<128x128xf32>
    %cst_18 = arith.constant dense<0.000000e+00> : vector<1x128xf32>
    %34 = tpu.matmul %31, %32, %cst_18 {dimension_numbers = #tpu.dot_dimension_numbers<[1], [1], [0], [0], [0, 0, 1, 0], [], []>} : vector<1x128xf32>, vector<128x128xf32>, vector<1x128xf32> -> vector<1x128xf32>
    %cst_19 = arith.constant 0.0883883461 : f32
    %35 = vector.broadcast %cst_19 : f32 to vector<1x128xf32>
    %36 = arith.mulf %34, %35 : vector<1x128xf32>
    %cst_20 = arith.constant dense<0xFF800000> : vector<1xf32>
    %37 = vector.multi_reduction <maximumf>, %36, %cst_20 [1] : vector<1x128xf32> to vector<1xf32>
    %38 = vector.shape_cast %37 : vector<1xf32> to vector<1x1xf32>
    %39 = vector.broadcast %38 : vector<1x1xf32> to vector<1x128xf32>
    %40 = arith.subf %36, %39 : vector<1x128xf32>
    %41 = math.exp %40 : vector<1x128xf32>
    %cst_21 = arith.constant dense<0.000000e+00> : vector<1xf32>
    %42 = vector.multi_reduction <add>, %41, %cst_21 [1] : vector<1x128xf32> to vector<1xf32>
    %43 = vector.shape_cast %42 : vector<1xf32> to vector<1x1xf32>
    %44 = tpu.reciprocal %43 : vector<1x1xf32> -> vector<1x1xf32>
    %45 = vector.broadcast %44 : vector<1x1xf32> to vector<1x128xf32>
    %46 = arith.mulf %41, %45 : vector<1x128xf32>
    %cst_22 = arith.constant dense<0.000000e+00> : vector<1x128xf32>
    %47 = tpu.matmul %46, %33, %cst_22 {dimension_numbers = #tpu.dot_dimension_numbers<[1], [0], [0], [1], [0, 0, 1, 1], [], []>} : vector<1x128xf32>, vector<128x128xf32>, vector<1x128xf32> -> vector<1x128xf32>
    %48 = tpu.concatenate %30, %47 in 1 : vector<1x128xf32>, vector<1x128xf32> -> vector<1x256xf32>
    %c0_23 = arith.constant 0 : index
    %c0_24 = arith.constant 0 : index
    %49 = vector.load %arg7[%c0_23, %c0_24] : memref<256x256xf32, #tpu.memory_space<vmem>>, vector<256x256xf32>
    %cst_25 = arith.constant dense<0.000000e+00> : vector<1x256xf32>
    %50 = tpu.matmul %48, %49, %cst_25 {dimension_numbers = #tpu.dot_dimension_numbers<[1], [0], [0], [1], [0, 0, 1, 1], [], []>} : vector<1x256xf32>, vector<256x256xf32>, vector<1x256xf32> -> vector<1x256xf32>
    %c0_26 = arith.constant 0 : index
    %c0_27 = arith.constant 0 : index
    %51 = vector.load %arg8[%c0_26, %c0_27] : memref<1x256xf32, #tpu.memory_space<vmem>>, vector<1x256xf32>
    %52 = arith.addf %50, %51 : vector<1x256xf32>
    %53 = arith.addf %29, %46 : vector<1x128xf32>
    %cst_28 = arith.constant 5.000000e-01 : f32
    %54 = vector.broadcast %cst_28 : f32 to vector<1x128xf32>
    %55 = arith.mulf %53, %54 : vector<1x128xf32>
    %c0_29 = arith.constant 0 : index
    %c0_30 = arith.constant 0 : index
    %c0_31 = arith.constant 0 : index
    %56 = vector.load %arg9[%c0_29, %c0_30, %c0_31] : memref<1x1x256xf32, #tpu.memory_space<vmem>>, vector<1x1x256xf32>
    %57 = vector.shape_cast %56 : vector<1x1x256xf32> to vector<1x256xf32>
    %58 = vector.shape_cast %52 : vector<1x256xf32> to vector<1x1x256xf32>
    tpu.vector_store %arg9[%c0_29, %c0_30, %c0_31], %58 {strides = array<i32>} : memref<1x1x256xf32, #tpu.memory_space<vmem>>, vector<1x1x256xf32>,
    %c0_32 = arith.constant 0 : index
    %c0_33 = arith.constant 0 : index
    %c0_34 = arith.constant 0 : index
    %59 = vector.load %arg10[%c0_32, %c0_33, %c0_34] : memref<1x1x128xf32, #tpu.memory_space<vmem>>, vector<1x1x128xf32>
    %60 = vector.shape_cast %59 : vector<1x1x128xf32> to vector<1x128xf32>
    %61 = vector.shape_cast %55 : vector<1x128xf32> to vector<1x1x128xf32>
    tpu.vector_store %arg10[%c0_32, %c0_33, %c0_34], %61 {strides = array<i32>} : memref<1x1x128xf32, #tpu.memory_space<vmem>>, vector<1x1x128xf32>,
    return
  }
  func.func @transform_0(%arg0: i32) -> (i32, i32, i32) {
    %c0_i32 = arith.constant 0 : i32
    %c0_i32_0 = arith.constant 0 : i32
    %c0_i32_1 = arith.constant 0 : i32
    return %arg0, %c0_i32, %c0_i32_0 : i32, i32, i32
  }
  func.func @transform_1(%arg0: i32) -> (i32, i32) {
    %c0_i32 = arith.constant 0 : i32
    %c0_i32_0 = arith.constant 0 : i32
    %c0_i32_1 = arith.constant 0 : i32
    return %c0_i32, %c0_i32_0 : i32, i32
  }
  func.func @transform_2(%arg0: i32) -> (i32, i32) {
    %c0_i32 = arith.constant 0 : i32
    %c0_i32_0 = arith.constant 0 : i32
    %c0_i32_1 = arith.constant 0 : i32
    return %c0_i32, %c0_i32_0 : i32, i32
  }
  func.func @transform_3(%arg0: i32) -> (i32, i32) {
    %c0_i32 = arith.constant 0 : i32
    %c0_i32_0 = arith.constant 0 : i32
    %c0_i32_1 = arith.constant 0 : i32
    return %c0_i32, %c0_i32_0 : i32, i32
  }
  func.func @transform_4(%arg0: i32) -> (i32, i32) {
    %c0_i32 = arith.constant 0 : i32
    %c0_i32_0 = arith.constant 0 : i32
    %c0_i32_1 = arith.constant 0 : i32
    return %c0_i32, %c0_i32_0 : i32, i32
  }
  func.func @transform_5(%arg0: i32) -> (i32, i32) {
    %c0_i32 = arith.constant 0 : i32
    %c0_i32_0 = arith.constant 0 : i32
    %c0_i32_1 = arith.constant 0 : i32
    return %c0_i32, %c0_i32_0 : i32, i32
  }
  func.func @transform_6(%arg0: i32) -> (i32, i32) {
    %c0_i32 = arith.constant 0 : i32
    %c0_i32_0 = arith.constant 0 : i32
    %c0_i32_1 = arith.constant 0 : i32
    return %c0_i32, %c0_i32_0 : i32, i32
  }
  func.func @transform_7(%arg0: i32) -> (i32, i32) {
    %c0_i32 = arith.constant 0 : i32
    %c0_i32_0 = arith.constant 0 : i32
    %c0_i32_1 = arith.constant 0 : i32
    return %c0_i32, %c0_i32_0 : i32, i32
  }
  func.func @transform_8(%arg0: i32) -> (i32, i32, i32) {
    %c0_i32 = arith.constant 0 : i32
    %c0_i32_0 = arith.constant 0 : i32
    %c0_i32_1 = arith.constant 0 : i32
    return %arg0, %c0_i32, %c0_i32_0 : i32, i32, i32
  }
  func.func @transform_9(%arg0: i32) -> (i32, i32, i32) {
    %c0_i32 = arith.constant 0 : i32
    %c0_i32_0 = arith.constant 0 : i32
    %c0_i32_1 = arith.constant 0 : i32
    return %arg0, %c0_i32, %c0_i32_0 : i32, i32, i32
  }
}

</mosaic_0001>

<llo_original>
// kernel: imu_encoder.1
$region0: #{imu_encoder.1}
  #allocation0 [shape = 'u32[]', space=smem, size = 0x4, offset = 0x4, fixed_abs, tag = 'smem constant byte address 0x4 - core index']
  #allocation1 [shape = 'u32[144,128]{1,0:T(1,128)}', space=vmem, size = 0x12000, scoped, tag = 'internal scratch']
  %s0 = inlined_call_operand.hbm [shape: f32[2,128,256], index: 0, kind: input, shape index: {}]
  %s1 = inlined_call_operand.vmem [shape: f32[1,256], index: 1, kind: input, shape index: {}]
  %s2 = inlined_call_operand.hbm [shape: f32[256,256], index: 2, kind: input, shape index: {}]
  %s3 = inlined_call_operand.vmem [shape: f32[1,256], index: 3, kind: input, shape index: {}]
  %s4 = inlined_call_operand.hbm [shape: f32[256,512], index: 4, kind: input, shape index: {}]
  %s5 = inlined_call_operand.hbm [shape: f32[1,512], index: 5, kind: input, shape index: {}]
  %s6 = inlined_call_operand.hbm [shape: f32[256,256], index: 6, kind: input, shape index: {}]
  %s7 = inlined_call_operand.vmem [shape: f32[1,256], index: 7, kind: input, shape index: {}]
  %s8 = inlined_call_operand.hbm [shape: f32[2,1,256], index: 8, kind: output, shape index: {0}]
  %s9 = inlined_call_operand.hbm [shape: f32[2,1,128], index: 9, kind: output, shape index: {1}]
  %10 = xla_tuple %s8, %s9
  %s11 = sld [smem:[#allocation0]]
  $region93: #{imu_encoder.1} parent=0
    _
  %s13 = ssub.s32 1, %s11
  %s14 = scalar_select 0, %s13, %s11
  $region1: #{imu_encoder.1} parent=0
    #allocation2 [shape = 'u8[262144]{0}', space=vmem, size = 0x40000, scoped, tag = 'input window, operand 0']
    #allocation3 [shape = 's32[2]{0}', space=sflag, size = 0x8, scoped, tag = 'scoped memory for imu_encoder.1']
    #allocation4 [shape = 's32[2]{0}', space=sflag, size = 0x8, scoped, tag = 'scoped memory for imu_encoder.1']
    #allocation5 [shape = 'u8[262144]{0}', space=vmem, size = 0x40000, scoped, tag = 'input window, operand 2, single buffered']
    #allocation6 [shape = 's32[1]{0}', space=sflag, size = 0x4, scoped, tag = 'scoped memory for imu_encoder.1']
    #allocation7 [shape = 'u8[524288]{0}', space=vmem, size = 0x80000, scoped, tag = 'input window, operand 4, single buffered']
    #allocation8 [shape = 'u8[2048]{0}', space=vmem, size = 0x800, scoped, tag = 'input window, operand 5, single buffered']
    #allocation9 [shape = 's32[1]{0}', space=sflag, size = 0x4, scoped, tag = 'scoped memory for imu_encoder.1']
    #allocation10 [shape = 'u8[262144]{0}', space=vmem, size = 0x40000, scoped, tag = 'input window, operand 6, single buffered']
    #allocation11 [shape = 'u8[2048]{0}', space=vmem, size = 0x800, scoped, tag = 'output window, operand 0']
    #allocation12 [shape = 'u8[1024]{0}', space=vmem, size = 0x400, scoped, tag = 'output window, operand 1']
    #allocation13 [shape = 's32[2]{0}', space=sflag, size = 0x8, scoped, tag = 'scoped memory for imu_encoder.1']
    %15 = vsyncpa [#allocation3], 0
    %s16 = scalar_lea.sflag [#allocation3], 1
    %17 = vsyncpa %s16, 0
    %18 = vsyncpa [#allocation6], 0
    %19 = vsyncpa [#allocation9], 0
    %20 = vsyncpa [#allocation4], 0
    %s21 = scalar_lea.sflag [#allocation4], 1
    %22 = vsyncpa %s21, 0
    %23 = vsyncpa [#allocation13], 0
    %s24 = scalar_lea.sflag [#allocation13], 1
    %25 = vsyncpa %s24, 0
    loop: start=0, step=1, limit=4
    $region2: #{imu_encoder.1} parent=1 // loop_pre_header
      _
    $region3: #{imu_encoder.1} parent=1 // loop_header
      %s27 = sphi 0, %s31
      %p28 = scmp.ge.s32.totalorder %s27, 4
      %s37 = sphi 0, %s39
      %s40 = sphi 0, %s37
      %s41 = sphi 0, %s40
      %s57 = sphi 0, %s41
      %s61 = sphi 0, %s61
      %s63 = sphi 0, %s61
      %s64 = sphi 0, %s63
      %s78 = sphi 0, %s64
      %s82 = sphi 0, %s82
      %s84 = sphi 0, %s82
      %s85 = sphi 0, %s84
      %s99 = sphi 0, %s85
      %s103 = sphi 0, %s103
      %s105 = sphi 0, %s103
      %s106 = sphi 0, %s105
      %s120 = sphi 0, %s106
      %s124 = sphi 0, %s124
      %s126 = sphi 0, %s124
      %s127 = sphi 0, %s126
      %s141 = sphi 0, %s127
      %s145 = sphi 0, %s145
      %s147 = sphi 0, %s145
      %s148 = sphi 0, %s147
      %s162 = sphi 0, %s148
      %s166 = sphi 0, %s166
      %s168 = sphi 0, %s166
      %s169 = sphi 0, %s168
      %s183 = sphi 0, %s169
      %s187 = sphi 0, %s187
      %s189 = sphi 0, %s187
      %s190 = sphi 0, %s189
      %s204 = sphi 0, %s190
      %s210 = sphi 0, %s212
      %s213 = sphi 0, %s210
      %s214 = sphi 0, %s213
      %s230 = sphi 0, %s214
      %s236 = sphi 0, %s238
      %s239 = sphi 0, %s236
      %s240 = sphi 0, %s239
      %s256 = sphi 0, %s240
    $region4: #{imu_encoder.1} parent=1 // loop_header_branch
      %30 = sbr.rel (%p28) target = $region8
    $region5: #{imu_encoder.1} parent=1 // loop_body
      %s32 = ssub.s32 %s27, 1
      %s33 = ssub.s32 %s27, 2
      %s34 = sadd.s32 %s27, 1
      %s35 = ssub.s32 %s27, %s34
      %p36 = scmp.eq.s32.totalorder %s35, 0
      %s38 = sadd.s32 %s37, 1
      %s39 = scalar_select %p36, %s37, %s38
      %p42 = pneg %p36
      %p43 = scmp.eq.s32.totalorder %s27, 1
      %p44 = por %p42, %p43
      %p45 = scmp.ne.s32.totalorder %s37, %s40
      %p46 = scmp.eq.s32.totalorder %s27, 0
      %p47 = por %p45, %p46
      %p48 = scmp.ne.s32.totalorder %s37, %s40
      %p49 = scmp.eq.s32.totalorder %s32, 1
      %p50 = por %p48, %p49
      %p51 = scmp.ne.s32.totalorder %s40, %s41
      %p52 = scmp.eq.s32.totalorder %s32, 0
      %p53 = por %p51, %p52
      %p54 = scmp.ne.s32.totalorder %s40, %s41
      %p55 = scmp.eq.s32.totalorder %s33, 1
      %p56 = por %p54, %p55
      %p58 = scmp.ne.s32.totalorder %s41, %s57
      %p59 = scmp.eq.s32.totalorder %s33, 0
      %p60 = por %p58, %p59
      %s62 = sadd.s32 %s61, 1
      %p65 = scmp.eq.s32.totalorder %s27, 1
      %p66 = scmp.ne.s32.totalorder %s61, %s63
      %p67 = scmp.eq.s32.totalorder %s27, 0
      %p68 = por %p66, %p67
      %p69 = scmp.ne.s32.totalorder %s61, %s63
      %p70 = scmp.eq.s32.totalorder %s32, 1
      %p71 = por %p69, %p70
      %p72 = scmp.ne.s32.totalorder %s63, %s64
      %p73 = scmp.eq.s32.totalorder %s32, 0
      %p74 = por %p72, %p73
      %p75 = scmp.ne.s32.totalorder %s63, %s64
      %p76 = scmp.eq.s32.totalorder %s33, 1
      %p77 = por %p75, %p76
      %p79 = scmp.ne.s32.totalorder %s64, %s78
      %p80 = scmp.eq.s32.totalorder %s33, 0
      %p81 = por %p79, %p80
      %s83 = sadd.s32 %s82, 1
      %p86 = scmp.eq.s32.totalorder %s27, 1
      %p87 = scmp.ne.s32.totalorder %s82, %s84
      %p88 = scmp.eq.s32.totalorder %s27, 0
      %p89 = por %p87, %p88
      %p90 = scmp.ne.s32.totalorder %s82, %s84
      %p91 = scmp.eq.s32.totalorder %s32, 1
      %p92 = por %p90, %p91
      %p93 = scmp.ne.s32.totalorder %s84, %s85
      %p94 = scmp.eq.s32.totalorder %s32, 0
      %p95 = por %p93, %p94
      %p96 = scmp.ne.s32.totalorder %s84, %s85
      %p97 = scmp.eq.s32.totalorder %s33, 1
      %p98 = por %p96, %p97
      %p100 = scmp.ne.s32.totalorder %s85, %s99
      %p101 = scmp.eq.s32.totalorder %s33, 0
      %p102 = por %p100, %p101
      %s104 = sadd.s32 %s103, 1
      %p107 = scmp.eq.s32.totalorder %s27, 1
      %p108 = scmp.ne.s32.totalorder %s103, %s105
      %p109 = scmp.eq.s32.totalorder %s27, 0
      %p110 = por %p108, %p109
      %p111 = scmp.ne.s32.totalorder %s103, %s105
      %p112 = scmp.eq.s32.totalorder %s32, 1
      %p113 = por %p111, %p112
      %p114 = scmp.ne.s32.totalorder %s105, %s106
      %p115 = scmp.eq.s32.totalorder %s32, 0
      %p116 = por %p114, %p115
      %p117 = scmp.ne.s32.totalorder %s105, %s106
      %p118 = scmp.eq.s32.totalorder %s33, 1
      %p119 = por %p117, %p118
      %p121 = scmp.ne.s32.totalorder %s106, %s120
      %p122 = scmp.eq.s32.totalorder %s33, 0
      %p123 = por %p121, %p122
      %s125 = sadd.s32 %s124, 1
      %p128 = scmp.eq.s32.totalorder %s27, 1
      %p129 = scmp.ne.s32.totalorder %s124, %s126
      %p130 = scmp.eq.s32.totalorder %s27, 0
      %p131 = por %p129, %p130
      %p132 = scmp.ne.s32.totalorder %s124, %s126
      %p133 = scmp.eq.s32.totalorder %s32, 1
      %p134 = por %p132, %p133
      %p135 = scmp.ne.s32.totalorder %s126, %s127
      %p136 = scmp.eq.s32.totalorder %s32, 0
      %p137 = por %p135, %p136
      %p138 = scmp.ne.s32.totalorder %s126, %s127
      %p139 = scmp.eq.s32.totalorder %s33, 1
      %p140 = por %p138, %p139
      %p142 = scmp.ne.s32.totalorder %s127, %s141
      %p143 = scmp.eq.s32.totalorder %s33, 0
      %p144 = por %p142, %p143
      %s146 = sadd.s32 %s145, 1
      %p149 = scmp.eq.s32.totalorder %s27, 1
      %p150 = scmp.ne.s32.totalorder %s145, %s147
      %p151 = scmp.eq.s32.totalorder %s27, 0
      %p152 = por %p150, %p151
      %p153 = scmp.ne.s32.totalorder %s145, %s147
      %p154 = scmp.eq.s32.totalorder %s32, 1
      %p155 = por %p153, %p154
      %p156 = scmp.ne.s32.totalorder %s147, %s148
      %p157 = scmp.eq.s32.totalorder %s32, 0
      %p158 = por %p156, %p157
      %p159 = scmp.ne.s32.totalorder %s147, %s148
      %p160 = scmp.eq.s32.totalorder %s33, 1
      %p161 = por %p159, %p160
      %p163 = scmp.ne.s32.totalorder %s148, %s162
      %p164 = scmp.eq.s32.totalorder %s33, 0
      %p165 = por %p163, %p164
      %s167 = sadd.s32 %s166, 1
      %p170 = scmp.eq.s32.totalorder %s27, 1
      %p171 = scmp.ne.s32.totalorder %s166, %s168
      %p172 = scmp.eq.s32.totalorder %s27, 0
      %p173 = por %p171, %p172
      %p174 = scmp.ne.s32.totalorder %s166, %s168
      %p175 = scmp.eq.s32.totalorder %s32, 1
      %p176 = por %p174, %p175
      %p177 = scmp.ne.s32.totalorder %s168, %s169
      %p178 = scmp.eq.s32.totalorder %s32, 0
      %p179 = por %p177, %p178
      %p180 = scmp.ne.s32.totalorder %s168, %s169
      %p181 = scmp.eq.s32.totalorder %s33, 1
      %p182 = por %p180, %p181
      %p184 = scmp.ne.s32.totalorder %s169, %s183
      %p185 = scmp.eq.s32.totalorder %s33, 0
      %p186 = por %p184, %p185
      %s188 = sadd.s32 %s187, 1
      %p191 = scmp.eq.s32.totalorder %s27, 1
      %p192 = scmp.ne.s32.totalorder %s187, %s189
      %p193 = scmp.eq.s32.totalorder %s27, 0
      %p194 = por %p192, %p193
      %p195 = scmp.ne.s32.totalorder %s187, %s189
      %p196 = scmp.eq.s32.totalorder %s32, 1
      %p197 = por %p195, %p196
      %p198 = scmp.ne.s32.totalorder %s189, %s190
      %p199 = scmp.eq.s32.totalorder %s32, 0
      %p200 = por %p198, %p199
      %p201 = scmp.ne.s32.totalorder %s189, %s190
      %p202 = scmp.eq.s32.totalorder %s33, 1
      %p203 = por %p201, %p202
      %p205 = scmp.ne.s32.totalorder %s190, %s204
      %p206 = scmp.eq.s32.totalorder %s33, 0
      %p207 = por %p205, %p206
      %s208 = ssub.s32 %s27, %s34
      %p209 = scmp.eq.s32.totalorder %s208, 0
      %s211 = sadd.s32 %s210, 1
      %s212 = scalar_select %p209, %s210, %s211
      %p215 = pneg %p209
      %p216 = scmp.eq.s32.totalorder %s27, 1
      %p217 = por %p215, %p216
      %p218 = scmp.ne.s32.totalorder %s210, %s213
      %p219 = scmp.eq.s32.totalorder %s27, 0
      %p220 = por %p218, %p219
      %p221 = scmp.ne.s32.totalorder %s210, %s213
      %p222 = scmp.eq.s32.totalorder %s32, 1
      %p223 = por %p221, %p222
      %p224 = scmp.ne.s32.totalorder %s213, %s214
      %p225 = scmp.eq.s32.totalorder %s32, 0
      %p226 = por %p224, %p225
      %p227 = scmp.ne.s32.totalorder %s213, %s214
      %p228 = scmp.eq.s32.totalorder %s33, 1
      %p229 = por %p227, %p228
      %p231 = scmp.ne.s32.totalorder %s214, %s230
      %p232 = scmp.eq.s32.totalorder %s33, 0
      %p233 = por %p231, %p232
      %s234 = ssub.s32 %s27, %s34
      %p235 = scmp.eq.s32.totalorder %s234, 0
      %s237 = sadd.s32 %s236, 1
      %s238 = scalar_select %p235, %s236, %s237
      %p241 = pneg %p235
      %p242 = scmp.eq.s32.totalorder %s27, 1
      %p243 = por %p241, %p242
      %p244 = scmp.ne.s32.totalorder %s236, %s239
      %p245 = scmp.eq.s32.totalorder %s27, 0
      %p246 = por %p244, %p245
      %p247 = scmp.ne.s32.totalorder %s236, %s239
      %p248 = scmp.eq.s32.totalorder %s32, 1
      %p249 = por %p247, %p248
      %p250 = scmp.ne.s32.totalorder %s239, %s240
      %p251 = scmp.eq.s32.totalorder %s32, 0
      %p252 = por %p250, %p251
      %p253 = scmp.ne.s32.totalorder %s239, %s240
      %p254 = scmp.eq.s32.totalorder %s33, 1
      %p255 = por %p253, %p254
      %p257 = scmp.ne.s32.totalorder %s240, %s256
      %p258 = scmp.eq.s32.totalorder %s33, 0
      %p259 = por %p257, %p258
      %p260 = scmp.le.s32.totalorder 1, %s27
      %p261 = scmp.lt.s32.totalorder %s27, 3
      %p262 = pnand %p260, %p261
      %p263 = pneg %p262
      // Predicated region
      $region9: #{imu_encoder.1} parent=5 // pred_check
        _
      $region10: #{imu_encoder.1} parent=5 // pred_check_branch
        %265 = sbr.rel (%p262) target = $region12
      $region11: #{imu_encoder.1} parent=5 // pred_region
        %s266 = ssub.s32 %s27, 1
        // Predicated region
        $region13: #{imu_encoder.1} parent=11 // pred_check
          %p267 = pneg %p74
        $region14: #{imu_encoder.1} parent=11 // pred_check_branch
          %269 = sbr.rel (%p267) target = $region16
        $region15: #{imu_encoder.1} parent=11 // pred_region
          _
        $region16: #{imu_encoder.1} parent=11 // pred_fallthru
          _
        // Predicated region
        $region17: #{imu_encoder.1} parent=11 // pred_check
          %p270 = pneg %p95
        $region18: #{imu_encoder.1} parent=11 // pred_check_branch
          %272 = sbr.rel (%p270) target = $region20
        $region19: #{imu_encoder.1} parent=11 // pred_region
          %s274 = ssub.s32 8192, 8192
          %275 = vsyncadd [#allocation6], %s274
          %s276 = sshll.u32 [#allocation5], 4
          %s277 = int_to_ptr.vmem [resolvable:$true] %s276
          %282 = dma.hbm_to_vmem [thread:$0]  %s2, 8192, %s277, [#allocation6], 256, 256, 16
        $region20: #{imu_encoder.1} parent=11 // pred_fallthru
          _
        // Predicated region
        $region21: #{imu_encoder.1} parent=11 // pred_check
          %p283 = pneg %p116
        $region22: #{imu_encoder.1} parent=11 // pred_check_branch
          %285 = sbr.rel (%p283) target = $region24
        $region23: #{imu_encoder.1} parent=11 // pred_region
          _
        $region24: #{imu_encoder.1} parent=11 // pred_fallthru
          _
        // Predicated region
        $region25: #{imu_encoder.1} parent=11 // pred_check
          %p286 = pneg %p137
        $region26: #{imu_encoder.1} parent=11 // pred_check_branch
          %288 = sbr.rel (%p286) target = $region28
        $region27: #{imu_encoder.1} parent=11 // pred_region
          %s290 = ssub.s32 16384, 16384
          %291 = vsyncadd [#allocation6], %s290
          %s292 = sshll.u32 [#allocation7], 4
          %s293 = int_to_ptr.vmem [resolvable:$true] %s292
          %298 = dma.hbm_to_vmem [thread:$0]  %s4, 16384, %s293, [#allocation6], 512, 512, 32
        $region28: #{imu_encoder.1} parent=11 // pred_fallthru
          _
        // Predicated region
        $region29: #{imu_encoder.1} parent=11 // pred_check
          %p299 = pneg %p158
        $region30: #{imu_encoder.1} parent=11 // pred_check_branch
          %301 = sbr.rel (%p299) target = $region32
        $region31: #{imu_encoder.1} parent=11 // pred_region
          %s303 = ssub.s32 64, 64
          %304 = vsyncadd [#allocation9], %s303
          %s306 = sshll.u32 [#allocation8], 4
          %s307 = int_to_ptr.vmem [resolvable:$true] %s306
          %309 = dma.hbm_to_vmem [thread:$0]  %s5, 64, %s307, [#allocation9]
        $region32: #{imu_encoder.1} parent=11 // pred_fallthru
          _
        // Predicated region
        $region33: #{imu_encoder.1} parent=11 // pred_check
          %p310 = pneg %p179
        $region34: #{imu_encoder.1} parent=11 // pred_check_branch
          %312 = sbr.rel (%p310) target = $region36
        $region35: #{imu_encoder.1} parent=11 // pred_region
          %s314 = ssub.s32 8192, 8192
          %315 = vsyncadd [#allocation9], %s314
          %s316 = sshll.u32 [#allocation10], 4
          %s317 = int_to_ptr.vmem [resolvable:$true] %s316
          %322 = dma.hbm_to_vmem [thread:$0]  %s6, 8192, %s317, [#allocation9], 256, 256, 16
        $region36: #{imu_encoder.1} parent=11 // pred_fallthru
          _
        // Predicated region
        $region37: #{imu_encoder.1} parent=11 // pred_check
          %p323 = pneg %p200
        $region38: #{imu_encoder.1} parent=11 // pred_check_branch
          %325 = sbr.rel (%p323) target = $region40
        $region39: #{imu_encoder.1} parent=11 // pred_region
          _
        $region40: #{imu_encoder.1} parent=11 // pred_fallthru
          _
      $region12: #{imu_encoder.1} parent=5 // pred_fallthru
        _
      %p326 = scmp.lt.s32.totalorder %s27, 2
      // Predicated region
      $region41: #{imu_encoder.1} parent=5 // pred_check
        %p327 = pneg %p326
      $region42: #{imu_encoder.1} parent=5 // pred_check_branch
        %329 = sbr.rel (%p327) target = $region44
      $region43: #{imu_encoder.1} parent=5 // pred_region
        // Predicated region
        $region45: #{imu_encoder.1} parent=43 // pred_check
          %p330 = pneg %p47
        $region46: #{imu_encoder.1} parent=43 // pred_check_branch
          %332 = sbr.rel (%p330) target = $region48
        $region47: #{imu_encoder.1} parent=43 // pred_region
          %s333 = sand.u32 %s37, 1
          %s334 = scalar_lea.sflag [#allocation3], %s333
          %s335 = sand.u32 %s37, 1
          %s336 = smul.addr %s335, 256
          %s337 = scalar_lea.vmem [#allocation2], %s336
          %s339 = ssub.s32 4096, 4096
          %340 = vsyncadd %s334, %s339
          %s341 = smul.addr %s27, 32
          %s342 = smul.addr %s341, 128
          %s343 = scalar_lea.hbm %s0, %s342
          %s344 = sshll.u32 %s337, 4
          %s345 = int_to_ptr.vmem [resolvable:$true] %s344
          %350 = dma.hbm_to_vmem [thread:$0]  %s343, 4096, %s345, %s334, 256, 256, 16
        $region48: #{imu_encoder.1} parent=43 // pred_fallthru
          _
      $region44: #{imu_encoder.1} parent=5 // pred_fallthru
        _
      %p351 = scmp.le.s32.totalorder 1, %s27
      %p352 = scmp.lt.s32.totalorder %s27, 3
      %p353 = pnand %p351, %p352
      %p354 = pneg %p353
      // Predicated region
      $region49: #{imu_encoder.1} parent=5 // pred_check
        _
      $region50: #{imu_encoder.1} parent=5 // pred_check_branch
        %356 = sbr.rel (%p353) target = $region52
      $region51: #{imu_encoder.1} parent=5 // pred_region
        %s357 = ssub.s32 %s27, 1
        %s358 = sand.u32 %s40, 1
        %s359 = scalar_lea.sflag [#allocation3], %s358
        %s360 = sand.u32 %s40, 1
        %s361 = smul.addr %s360, 256
        %s362 = scalar_lea.vmem [#allocation2], %s361
        // Predicated region
        $region53: #{imu_encoder.1} parent=51 // pred_check
          %p363 = pneg %p53
        $region54: #{imu_encoder.1} parent=51 // pred_check_branch
          %365 = sbr.rel (%p363) target = $region56
        $region55: #{imu_encoder.1} parent=51 // pred_region
          %366 = dma.done %s359, 4096
        $region56: #{imu_encoder.1} parent=51 // pred_fallthru
          _
        // Predicated region
        $region57: #{imu_encoder.1} parent=51 // pred_check
          %p367 = pneg %p95
        $region58: #{imu_encoder.1} parent=51 // pred_check_branch
          %369 = sbr.rel (%p367) target = $region60
        $region59: #{imu_encoder.1} parent=51 // pred_region
          %370 = dma.done [#allocation6], 8192
        $region60: #{imu_encoder.1} parent=51 // pred_fallthru
          _
        // Predicated region
        $region61: #{imu_encoder.1} parent=51 // pred_check
          %p371 = pneg %p137
        $region62: #{imu_encoder.1} parent=51 // pred_check_branch
          %373 = sbr.rel (%p371) target = $region64
        $region63: #{imu_encoder.1} parent=51 // pred_region
          %374 = dma.done [#allocation6], 16384
        $region64: #{imu_encoder.1} parent=51 // pred_fallthru
          _
        // Predicated region
        $region65: #{imu_encoder.1} parent=51 // pred_check
          %p375 = pneg %p158
        $region66: #{imu_encoder.1} parent=51 // pred_check_branch
          %377 = sbr.rel (%p375) target = $region68
        $region67: #{imu_encoder.1} parent=51 // pred_region
          %378 = dma.done [#allocation9], 64
        $region68: #{imu_encoder.1} parent=51 // pred_fallthru
          _
        // Predicated region
        $region69: #{imu_encoder.1} parent=51 // pred_check
          %p379 = pneg %p179
        $region70: #{imu_encoder.1} parent=51 // pred_check_branch
          %381 = sbr.rel (%p379) target = $region72
        $region71: #{imu_encoder.1} parent=51 // pred_region
          %382 = dma.done [#allocation9], 8192
        $region72: #{imu_encoder.1} parent=51 // pred_fallthru
          _
        %s383 = sand.u32 %s40, 1
        %s384 = scalar_lea.sflag [#allocation3], %s383
        %s385 = sand.u32 %s40, 1
        %s386 = smul.addr %s385, 256
        %s387 = scalar_lea.vmem [#allocation2], %s386
        %p388 = pneg %p53
        %p389 = pneg %p50
        %p390 = pneg %p74
        %p391 = pneg %p71
        %p392 = pneg %p95
        %p393 = pneg %p92
        %p394 = pneg %p116
        %p395 = pneg %p113
        %p396 = pneg %p137
        %p397 = pneg %p134
        %p398 = pneg %p158
        %p399 = pneg %p155
        %p400 = pneg %p179
        %p401 = pneg %p176
        %p402 = pneg %p200
        %p403 = pneg %p197
        %p404 = pneg %p226
        %p405 = pneg %p223
        %s406 = sand.u32 %s213, 1
        %s407 = scalar_lea.sflag [#allocation4], %s406
        %s408 = sand.u32 %s213, 1
        %s409 = smul.addr %s408, 2
        %s410 = scalar_lea.vmem [#allocation11], %s409
        %p411 = pneg %p252
        %p412 = pneg %p249
        %s413 = sand.u32 %s239, 1
        %s414 = scalar_lea.sflag [#allocation13], %s413
        %s415 = sand.u32 %s239, 1
        %s416 = scalar_lea.vmem [#allocation12], %s415
        %v417 = vld [vmem:[%s362] sm:$0xff]
        %v418 = vld [vmem:[%s362 + $0x8] sm:$0xff]
        %v419 = vld [vmem:[%s362 + $0x10] sm:$0xff]
        %v420 = vld [vmem:[%s362 + $0x18] sm:$0xff]
        %v421 = vld [vmem:[%s362 + $0x20] sm:$0xff]
        %v422 = vld [vmem:[%s362 + $0x28] sm:$0xff]
        %v423 = vld [vmem:[%s362 + $0x30] sm:$0xff]
        %v424 = vld [vmem:[%s362 + $0x38] sm:$0xff]
        %v425 = vld [vmem:[%s362 + $0x40] sm:$0xff]
        %v426 = vld [vmem:[%s362 + $0x48] sm:$0xff]
        %v427 = vld [vmem:[%s362 + $0x50] sm:$0xff]
        %v428 = vld [vmem:[%s362 + $0x58] sm:$0xff]
        %v429 = vld [vmem:[%s362 + $0x60] sm:$0xff]
        %v430 = vld [vmem:[%s362 + $0x68] sm:$0xff]
        %v431 = vld [vmem:[%s362 + $0x70] sm:$0xff]
        %v432 = vld [vmem:[%s362 + $0x78] sm:$0xff]
        %v433 = vld [vmem:[%s362 + $0x80] sm:$0xff]
        %v434 = vld [vmem:[%s362 + $0x88] sm:$0xff]
        %v435 = vld [vmem:[%s362 + $0x90] sm:$0xff]
        %v436 = vld [vmem:[%s362 + $0x98] sm:$0xff]
        %v437 = vld [vmem:[%s362 + $0xa0] sm:$0xff]
        %v438 = vld [vmem:[%s362 + $0xa8] sm:$0xff]
        %v439 = vld [vmem:[%s362 + $0xb0] sm:$0xff]
        %v440 = vld [vmem:[%s362 + $0xb8] sm:$0xff]
        %v441 = vld [vmem:[%s362 + $0xc0] sm:$0xff]
        %v442 = vld [vmem:[%s362 + $0xc8] sm:$0xff]
        %v443 = vld [vmem:[%s362 + $0xd0] sm:$0xff]
        %v444 = vld [vmem:[%s362 + $0xd8] sm:$0xff]
        %v445 = vld [vmem:[%s362 + $0xe0] sm:$0xff]
        %v446 = vld [vmem:[%s362 + $0xe8] sm:$0xff]
        %v447 = vld [vmem:[%s362 + $0xf0] sm:$0xff]
        %v448 = vld [vmem:[%s362 + $0xf8] sm:$0xff]
        %v449 = vld [vmem:[%s1] sm:$0x3]
        %v450 = vld [vmem:[#allocation5] sm:$0xff]
        %v451 = vld [vmem:[#allocation5 + $0x8] sm:$0xff]
        %v452 = vld [vmem:[#allocation5 + $0x10] sm:$0xff]
        %v453 = vld [vmem:[#allocation5 + $0x18] sm:$0xff]
        %v454 = vld [vmem:[#allocation5 + $0x20] sm:$0xff]
        %v455 = vld [vmem:[#allocation5 + $0x28] sm:$0xff]
        %v456 = vld [vmem:[#allocation5 + $0x30] sm:$0xff]
        %v457 = vld [vmem:[#allocation5 + $0x38] sm:$0xff]
        %v458 = vld [vmem:[#allocation5 + $0x40] sm:$0xff]
        %v459 = vld [vmem:[#allocation5 + $0x48] sm:$0xff]
        %v460 = vld [vmem:[#allocation5 + $0x50] sm:$0xff]
        %v461 = vld [vmem:[#allocation5 + $0x58] sm:$0xff]
        %v462 = vld [vmem:[#allocation5 + $0x60] sm:$0xff]
        %v463 = vld [vmem:[#allocation5 + $0x68] sm:$0xff]
        %v464 = vld [vmem:[#allocation5 + $0x70] sm:$0xff]
        %v465 = vld [vmem:[#allocation5 + $0x78] sm:$0xff]
        %v466 = vld [vmem:[#allocation5 + $0x80] sm:$0xff]
        %v467 = vld [vmem:[#allocation5 + $0x88] sm:$0xff]
        %v468 = vld [vmem:[#allocation5 + $0x90] sm:$0xff]
        %v469 = vld [vmem:[#allocation5 + $0x98] sm:$0xff]
        %v470 = vld [vmem:[#allocation5 + $0xa0] sm:$0xff]
        %v471 = vld [vmem:[#allocation5 + $0xa8] sm:$0xff]
        %v472 = vld [vmem:[#allocation5 + $0xb0] sm:$0xff]
        %v473 = vld [vmem:[#allocation5 + $0xb8] sm:$0xff]
        %v474 = vld [vmem:[#allocation5 + $0xc0] sm:$0xff]
        %v475 = vld [vmem:[#allocation5 + $0xc8] sm:$0xff]
        %v476 = vld [vmem:[#allocation5 + $0xd0] sm:$0xff]
        %v477 = vld [vmem:[#allocation5 + $0xd8] sm:$0xff]
        %v478 = vld [vmem:[#allocation5 + $0xe0] sm:$0xff]
        %v479 = vld [vmem:[#allocation5 + $0xe8] sm:$0xff]
        %v480 = vld [vmem:[#allocation5 + $0xf0] sm:$0xff]
        %v481 = vld [vmem:[#allocation5 + $0xf8] sm:$0xff]
        %v482 = vld [vmem:[#allocation5 + $0x100] sm:$0xff]
        %v483 = vld [vmem:[#allocation5 + $0x108] sm:$0xff]
        %v484 = vld [vmem:[#allocation5 + $0x110] sm:$0xff]
        %v485 = vld [vmem:[#allocation5 + $0x118] sm:$0xff]
        %v486 = vld [vmem:[#allocation5 + $0x120] sm:$0xff]
        %v487 = vld [vmem:[#allocation5 + $0x128] sm:$0xff]
        %v488 = vld [vmem:[#allocation5 + $0x130] sm:$0xff]
        %v489 = vld [vmem:[#allocation5 + $0x138] sm:$0xff]
        %v490 = vld [vmem:[#allocation5 + $0x140] sm:$0xff]
        %v491 = vld [vmem:[#allocation5 + $0x148] sm:$0xff]
        %v492 = vld [vmem:[#allocation5 + $0x150] sm:$0xff]
        %v493 = vld [vmem:[#allocation5 + $0x158] sm:$0xff]
        %v494 = vld [vmem:[#allocation5 + $0x160] sm:$0xff]
        %v495 = vld [vmem:[#allocation5 + $0x168] sm:$0xff]
        %v496 = vld [vmem:[#allocation5 + $0x170] sm:$0xff]
        %v497 = vld [vmem:[#allocation5 + $0x178] sm:$0xff]
        %v498 = vld [vmem:[#allocation5 + $0x180] sm:$0xff]
        %v499 = vld [vmem:[#allocation5 + $0x188] sm:$0xff]
        %v500 = vld [vmem:[#allocation5 + $0x190] sm:$0xff]
        %v501 = vld [vmem:[#allocation5 + $0x198] sm:$0xff]
        %v502 = vld [vmem:[#allocation5 + $0x1a0] sm:$0xff]
        %v503 = vld [vmem:[#allocation5 + $0x1a8] sm:$0xff]
        %v504 = vld [vmem:[#allocation5 + $0x1b0] sm:$0xff]
        %v505 = vld [vmem:[#allocation5 + $0x1b8] sm:$0xff]
        %v506 = vld [vmem:[#allocation5 + $0x1c0] sm:$0xff]
        %v507 = vld [vmem:[#allocation5 + $0x1c8] sm:$0xff]
        %v508 = vld [vmem:[#allocation5 + $0x1d0] sm:$0xff]
        %v509 = vld [vmem:[#allocation5 + $0x1d8] sm:$0xff]
        %v510 = vld [vmem:[#allocation5 + $0x1e0] sm:$0xff]
        %v511 = vld [vmem:[#allocation5 + $0x1e8] sm:$0xff]
        %v512 = vld [vmem:[#allocation5 + $0x1f0] sm:$0xff]
        %v513 = vld [vmem:[#allocation5 + $0x1f8] sm:$0xff]
        %v514 = vld [vmem:[%s3] sm:$0x3]
        %v516 = vlaneseq
        %v517 = vshrl.u32 %v516, 7
        %v518 = vsub.s32 0, %v517
        %v519 = vrot.slane %v449, %v518
        %v520 = vlaneseq
        %v521 = vshrl.u32 %v520, 7
        %v522 = vsub.s32 1, %v521
        %v523 = vrot.slane %v449, %v522
        %v527 = vlaneseq
        %v528 = vshrl.u32 %v527, 7
        %v529 = vsub.s32 0, %v528
        %v530 = vrot.slane %v514, %v529
        %v531 = vlaneseq
        %v532 = vshrl.u32 %v531, 7
        %v533 = vsub.s32 1, %v532
        %v534 = vrot.slane %v514, %v533
        %537 = vmatprep.subr.mxu0 %v451
        %538 = vmatpush1.msra.mxu0 %v450
        %539 = vmatprep.subr.mxu0 %v453
        %540 = vmatpush1.msra.mxu0 %v452
        %541 = vmatprep.subr.mxu0 %v455
        %542 = vmatpush1.msra.mxu0 %v454
        %543 = vmatprep.subr.mxu0 %v457
        %544 = vmatpush1.msra.mxu0 %v456
        %545 = vmatprep.subr.mxu0 %v459
        %546 = vmatpush1.msra.mxu0 %v458
        %547 = vmatprep.subr.mxu0 %v461
        %548 = vmatpush1.msra.mxu0 %v460
        %549 = vmatprep.subr.mxu0 %v463
        %550 = vmatpush1.msra.mxu0 %v462
        %551 = vmatprep.subr.mxu0 %v465
        %552 = vmatpush1.msra.mxu0 %v464
        %553 = vmatprep.subr.mxu0 %v467
        %554 = vmatpush1.msra.mxu0 %v466
        %555 = vmatprep.subr.mxu0 %v469
        %556 = vmatpush1.msra.mxu0 %v468
        %557 = vmatprep.subr.mxu0 %v471
        %558 = vmatpush1.msra.mxu0 %v470
        %559 = vmatprep.subr.mxu0 %v473
        %560 = vmatpush1.msra.mxu0 %v472
        %561 = vmatprep.subr.mxu0 %v475
        %562 = vmatpush1.msra.mxu0 %v474
        %563 = vmatprep.subr.mxu0 %v477
        %564 = vmatpush1.msra.mxu0 %v476
        %565 = vmatprep.subr.mxu0 %v479
        %566 = vmatpush1.msra.mxu0 %v478
        %567 = vmatprep.subr.mxu0 %v481
        %568 = vmatpush1.msra.mxu0 %v480
        %569 = vmatprep.subr.mxu0 %v483
        %570 = vmatpush1.msra.mxu0 %v482
        %571 = vmatprep.subr.mxu0 %v485
        %572 = vmatpush1.msra.mxu0 %v484
        %573 = vmatprep.subr.mxu0 %v487
        %574 = vmatpush1.msra.mxu0 %v486
        %575 = vmatprep.subr.mxu0 %v489
        %576 = vmatpush1.msra.mxu0 %v488
        %577 = vmatprep.subr.mxu0 %v491
        %578 = vmatpush1.msra.mxu0 %v490
        %579 = vmatprep.subr.mxu0 %v493
        %580 = vmatpush1.msra.mxu0 %v492
        %581 = vmatprep.subr.mxu0 %v495
        %582 = vmatpush1.msra.mxu0 %v494
        %583 = vmatprep.subr.mxu0 %v497
        %584 = vmatpush1.msra.mxu0 %v496
        %585 = vmatprep.subr.mxu0 %v499
        %586 = vmatpush1.msra.mxu0 %v498
        %587 = vmatprep.subr.mxu0 %v501
        %588 = vmatpush1.msra.mxu0 %v500
        %589 = vmatprep.subr.mxu0 %v503
        %590 = vmatpush1.msra.mxu0 %v502
        %591 = vmatprep.subr.mxu0 %v505
        %592 = vmatpush1.msra.mxu0 %v504
        %593 = vmatprep.subr.mxu0 %v507
        %594 = vmatpush1.msra.mxu0 %v506
        %595 = vmatprep.subr.mxu0 %v509
        %596 = vmatpush1.msra.mxu0 %v508
        %597 = vmatprep.subr.mxu0 %v511
        %598 = vmatpush1.msra.mxu0 %v510
        %599 = vmatprep.subr.mxu0 %v513
        %600 = vmatpush1.msra.mxu0 %v512
        %601 = vmatprep.mubr.f32.mxu0 %v523
        %602 = vmatmul.mubr.f32.gmra.mrb[0].mxu0 %v519
        %v603 = vpop.f32.mrb[0].mxu0
        %v604 = vadd.f32 %v530, %v603
        %v605 = vpop.f32.mrb[0].mxu0
        %v606 = vadd.f32 %v534, %v605
        %607 = vdwg.mxu0
        %v608 = vld [vmem:[#allocation7] sm:$0xff]
        %v609 = vld [vmem:[#allocation7 + $0x8] sm:$0xff]
        %v610 = vld [vmem:[#allocation7 + $0x10] sm:$0xff]
        %v611 = vld [vmem:[#allocation7 + $0x18] sm:$0xff]
        %v612 = vld [vmem:[#allocation7 + $0x20] sm:$0xff]
        %v613 = vld [vmem:[#allocation7 + $0x28] sm:$0xff]
        %v614 = vld [vmem:[#allocation7 + $0x30] sm:$0xff]
        %v615 = vld [vmem:[#allocation7 + $0x38] sm:$0xff]
        %v616 = vld [vmem:[#allocation7 + $0x40] sm:$0xff]
        %v617 = vld [vmem:[#allocation7 + $0x48] sm:$0xff]
        %v618 = vld [vmem:[#allocation7 + $0x50] sm:$0xff]
        %v619 = vld [vmem:[#allocation7 + $0x58] sm:$0xff]
        %v620 = vld [vmem:[#allocation7 + $0x60] sm:$0xff]
        %v621 = vld [vmem:[#allocation7 + $0x68] sm:$0xff]
        %v622 = vld [vmem:[#allocation7 + $0x70] sm:$0xff]
        %v623 = vld [vmem:[#allocation7 + $0x78] sm:$0xff]
        %v624 = vld [vmem:[#allocation7 + $0x80] sm:$0xff]
        %v625 = vld [vmem:[#allocation7 + $0x88] sm:$0xff]
        %v626 = vld [vmem:[#allocation7 + $0x90] sm:$0xff]
        %v627 = vld [vmem:[#allocation7 + $0x98] sm:$0xff]
        %v628 = vld [vmem:[#allocation7 + $0xa0] sm:$0xff]
        %v629 = vld [vmem:[#allocation7 + $0xa8] sm:$0xff]
        %v630 = vld [vmem:[#allocation7 + $0xb0] sm:$0xff]
        %v631 = vld [vmem:[#allocation7 + $0xb8] sm:$0xff]
        %v632 = vld [vmem:[#allocation7 + $0xc0] sm:$0xff]
        %v633 = vld [vmem:[#allocation7 + $0xc8] sm:$0xff]
        %v634 = vld [vmem:[#allocation7 + $0xd0] sm:$0xff]
        %v635 = vld [vmem:[#allocation7 + $0xd8] sm:$0xff]
        %v636 = vld [vmem:[#allocation7 + $0xe0] sm:$0xff]
        %v637 = vld [vmem:[#allocation7 + $0xe8] sm:$0xff]
        %v638 = vld [vmem:[#allocation7 + $0xf0] sm:$0xff]
        %v639 = vld [vmem:[#allocation7 + $0xf8] sm:$0xff]
        %v640 = vld [vmem:[#allocation7 + $0x100] sm:$0xff]
        %v641 = vld [vmem:[#allocation7 + $0x108] sm:$0xff]
        %v642 = vld [vmem:[#allocation7 + $0x110] sm:$0xff]
        %v643 = vld [vmem:[#allocation7 + $0x118] sm:$0xff]
        %v644 = vld [vmem:[#allocation7 + $0x120] sm:$0xff]
        %v645 = vld [vmem:[#allocation7 + $0x128] sm:$0xff]
        %v646 = vld [vmem:[#allocation7 + $0x130] sm:$0xff]
        %v647 = vld [vmem:[#allocation7 + $0x138] sm:$0xff]
        %v648 = vld [vmem:[#allocation7 + $0x140] sm:$0xff]
        %v649 = vld [vmem:[#allocation7 + $0x148] sm:$0xff]
        %v650 = vld [vmem:[#allocation7 + $0x150] sm:$0xff]
        %v651 = vld [vmem:[#allocation7 + $0x158] sm:$0xff]
        %v652 = vld [vmem:[#allocation7 + $0x160] sm:$0xff]
        %v653 = vld [vmem:[#allocation7 + $0x168] sm:$0xff]
        %v654 = vld [vmem:[#allocation7 + $0x170] sm:$0xff]
        %v655 = vld [vmem:[#allocation7 + $0x178] sm:$0xff]
        %v656 = vld [vmem:[#allocation7 + $0x180] sm:$0xff]
        %v657 = vld [vmem:[#allocation7 + $0x188] sm:$0xff]
        %v658 = vld [vmem:[#allocation7 + $0x190] sm:$0xff]
        %v659 = vld [vmem:[#allocation7 + $0x198] sm:$0xff]
        %v660 = vld [vmem:[#allocation7 + $0x1a0] sm:$0xff]
        %v661 = vld [vmem:[#allocation7 + $0x1a8] sm:$0xff]
        %v662 = vld [vmem:[#allocation7 + $0x1b0] sm:$0xff]
        %v663 = vld [vmem:[#allocation7 + $0x1b8] sm:$0xff]
        %v664 = vld [vmem:[#allocation7 + $0x1c0] sm:$0xff]
        %v665 = vld [vmem:[#allocation7 + $0x1c8] sm:$0xff]
        %v666 = vld [vmem:[#allocation7 + $0x1d0] sm:$0xff]
        %v667 = vld [vmem:[#allocation7 + $0x1d8] sm:$0xff]
        %v668 = vld [vmem:[#allocation7 + $0x1e0] sm:$0xff]
        %v669 = vld [vmem:[#allocation7 + $0x1e8] sm:$0xff]
        %v670 = vld [vmem:[#allocation7 + $0x1f0] sm:$0xff]
        %v671 = vld [vmem:[#allocation7 + $0x1f8] sm:$0xff]
        %v672 = vld [vmem:[#allocation7 + $0x200] sm:$0xff]
        %v673 = vld [vmem:[#allocation7 + $0x208] sm:$0xff]
        %v674 = vld [vmem:[#allocation7 + $0x210] sm:$0xff]
        %v675 = vld [vmem:[#allocation7 + $0x218] sm:$0xff]
        %v676 = vld [vmem:[#allocation7 + $0x220] sm:$0xff]
        %v677 = vld [vmem:[#allocation7 + $0x228] sm:$0xff]
        %v678 = vld [vmem:[#allocation7 + $0x230] sm:$0xff]
        %v679 = vld [vmem:[#allocation7 + $0x238] sm:$0xff]
        %v680 = vld [vmem:[#allocation7 + $0x240] sm:$0xff]
        %v681 = vld [vmem:[#allocation7 + $0x248] sm:$0xff]
        %v682 = vld [vmem:[#allocation7 + $0x250] sm:$0xff]
        %v683 = vld [vmem:[#allocation7 + $0x258] sm:$0xff]
        %v684 = vld [vmem:[#allocation7 + $0x260] sm:$0xff]
        %v685 = vld [vmem:[#allocation7 + $0x268] sm:$0xff]
        %v686 = vld [vmem:[#allocation7 + $0x270] sm:$0xff]
        %v687 = vld [vmem:[#allocation7 + $0x278] sm:$0xff]
        %v688 = vld [vmem:[#allocation7 + $0x280] sm:$0xff]
        %v689 = vld [vmem:[#allocation7 + $0x288] sm:$0xff]
        %v690 = vld [vmem:[#allocation7 + $0x290] sm:$0xff]
        %v691 = vld [vmem:[#allocation7 + $0x298] sm:$0xff]
        %v692 = vld [vmem:[#allocation7 + $0x2a0] sm:$0xff]
        %v693 = vld [vmem:[#allocation7 + $0x2a8] sm:$0xff]
        %v694 = vld [vmem:[#allocation7 + $0x2b0] sm:$0xff]
        %v695 = vld [vmem:[#allocation7 + $0x2b8] sm:$0xff]
        %v696 = vld [vmem:[#allocation7 + $0x2c0] sm:$0xff]
        %v697 = vld [vmem:[#allocation7 + $0x2c8] sm:$0xff]
        %v698 = vld [vmem:[#allocation7 + $0x2d0] sm:$0xff]
        %v699 = vld [vmem:[#allocation7 + $0x2d8] sm:$0xff]
        %v700 = vld [vmem:[#allocation7 + $0x2e0] sm:$0xff]
        %v701 = vld [vmem:[#allocation7 + $0x2e8] sm:$0xff]
        %v702 = vld [vmem:[#allocation7 + $0x2f0] sm:$0xff]
        %v703 = vld [vmem:[#allocation7 + $0x2f8] sm:$0xff]
        %v704 = vld [vmem:[#allocation7 + $0x300] sm:$0xff]
        %v705 = vld [vmem:[#allocation7 + $0x308] sm:$0xff]
        %v706 = vld [vmem:[#allocation7 + $0x310] sm:$0xff]
        %v707 = vld [vmem:[#allocation7 + $0x318] sm:$0xff]
        %v708 = vld [vmem:[#allocation7 + $0x320] sm:$0xff]
        %v709 = vld [vmem:[#allocation7 + $0x328] sm:$0xff]
        %v710 = vld [vmem:[#allocation7 + $0x330] sm:$0xff]
        %v711 = vld [vmem:[#allocation7 + $0x338] sm:$0xff]
        %v712 = vld [vmem:[#allocation7 + $0x340] sm:$0xff]
        %v713 = vld [vmem:[#allocation7 + $0x348] sm:$0xff]
        %v714 = vld [vmem:[#allocation7 + $0x350] sm:$0xff]
        %v715 = vld [vmem:[#allocation7 + $0x358] sm:$0xff]
        %v716 = vld [vmem:[#allocation7 + $0x360] sm:$0xff]
        %v717 = vld [vmem:[#allocation7 + $0x368] sm:$0xff]
        %v718 = vld [vmem:[#allocation7 + $0x370] sm:$0xff]
        %v719 = vld [vmem:[#allocation7 + $0x378] sm:$0xff]
        %v720 = vld [vmem:[#allocation7 + $0x380] sm:$0xff]
        %v721 = vld [vmem:[#allocation7 + $0x388] sm:$0xff]
        %v722 = vld [vmem:[#allocation7 + $0x390] sm:$0xff]
        %v723 = vld [vmem:[#allocation7 + $0x398] sm:$0xff]
        %v724 = vld [vmem:[#allocation7 + $0x3a0] sm:$0xff]
        %v725 = vld [vmem:[#allocation7 + $0x3a8] sm:$0xff]
        %v726 = vld [vmem:[#allocation7 + $0x3b0] sm:$0xff]
        %v727 = vld [vmem:[#allocation7 + $0x3b8] sm:$0xff]
        %v728 = vld [vmem:[#allocation7 + $0x3c0] sm:$0xff]
        %v729 = vld [vmem:[#allocation7 + $0x3c8] sm:$0xff]
        %v730 = vld [vmem:[#allocation7 + $0x3d0] sm:$0xff]
        %v731 = vld [vmem:[#allocation7 + $0x3d8] sm:$0xff]
        %v732 = vld [vmem:[#allocation7 + $0x3e0] sm:$0xff]
        %v733 = vld [vmem:[#allocation7 + $0x3e8] sm:$0xff]
        %v734 = vld [vmem:[#allocation7 + $0x3f0] sm:$0xff]
        %v735 = vld [vmem:[#allocation7 + $0x3f8] sm:$0xff]
        %v736 = vld [vmem:[#allocation8] sm:$0xf]
        %v738 = vlaneseq
        %v739 = vshrl.u32 %v738, 7
        %v740 = vsub.s32 0, %v739
        %v741 = vrot.slane %v736, %v740
        %v742 = vlaneseq
        %v743 = vshrl.u32 %v742, 7
        %v744 = vsub.s32 1, %v743
        %v745 = vrot.slane %v736, %v744
        %v746 = vlaneseq
        %v747 = vshrl.u32 %v746, 7
        %v748 = vsub.s32 2, %v747
        %v749 = vrot.slane %v736, %v748
        %v750 = vlaneseq
        %v751 = vshrl.u32 %v750, 7
        %v752 = vsub.s32 3, %v751
        %v753 = vrot.slane %v736, %v752
        %758 = vmatprep.subr.mxu0 %v609
        %759 = vmatpush1.msra.mxu0 %v608
        %760 = vmatprep.subr.mxu0 %v613
        %761 = vmatpush1.msra.mxu0 %v612
        %762 = vmatprep.subr.mxu0 %v617
        %763 = vmatpush1.msra.mxu0 %v616
        %764 = vmatprep.subr.mxu0 %v621
        %765 = vmatpush1.msra.mxu0 %v620
        %766 = vmatprep.subr.mxu0 %v625
        %767 = vmatpush1.msra.mxu0 %v624
        %768 = vmatprep.subr.mxu0 %v629
        %769 = vmatpush1.msra.mxu0 %v628
        %770 = vmatprep.subr.mxu0 %v633
        %771 = vmatpush1.msra.mxu0 %v632
        %772 = vmatprep.subr.mxu0 %v637
        %773 = vmatpush1.msra.mxu0 %v636
        %774 = vmatprep.subr.mxu0 %v641
        %775 = vmatpush1.msra.mxu0 %v640
        %776 = vmatprep.subr.mxu0 %v645
        %777 = vmatpush1.msra.mxu0 %v644
        %778 = vmatprep.subr.mxu0 %v649
        %779 = vmatpush1.msra.mxu0 %v648
        %780 = vmatprep.subr.mxu0 %v653
        %781 = vmatpush1.msra.mxu0 %v652
        %782 = vmatprep.subr.mxu0 %v657
        %783 = vmatpush1.msra.mxu0 %v656
        %784 = vmatprep.subr.mxu0 %v661
        %785 = vmatpush1.msra.mxu0 %v660
        %786 = vmatprep.subr.mxu0 %v665
        %787 = vmatpush1.msra.mxu0 %v664
        %788 = vmatprep.subr.mxu0 %v669
        %789 = vmatpush1.msra.mxu0 %v668
        %790 = vmatprep.subr.mxu0 %v673
        %791 = vmatpush1.msra.mxu0 %v672
        %792 = vmatprep.subr.mxu0 %v677
        %793 = vmatpush1.msra.mxu0 %v676
        %794 = vmatprep.subr.mxu0 %v681
        %795 = vmatpush1.msra.mxu0 %v680
        %796 = vmatprep.subr.mxu0 %v685
        %797 = vmatpush1.msra.mxu0 %v684
        %798 = vmatprep.subr.mxu0 %v689
        %799 = vmatpush1.msra.mxu0 %v688
        %800 = vmatprep.subr.mxu0 %v693
        %801 = vmatpush1.msra.mxu0 %v692
        %802 = vmatprep.subr.mxu0 %v697
        %803 = vmatpush1.msra.mxu0 %v696
        %804 = vmatprep.subr.mxu0 %v701
        %805 = vmatpush1.msra.mxu0 %v700
        %806 = vmatprep.subr.mxu0 %v705
        %807 = vmatpush1.msra.mxu0 %v704
        %808 = vmatprep.subr.mxu0 %v709
        %809 = vmatpush1.msra.mxu0 %v708
        %810 = vmatprep.subr.mxu0 %v713
        %811 = vmatpush1.msra.mxu0 %v712
        %812 = vmatprep.subr.mxu0 %v717
        %813 = vmatpush1.msra.mxu0 %v716
        %814 = vmatprep.subr.mxu0 %v721
        %815 = vmatpush1.msra.mxu0 %v720
        %816 = vmatprep.subr.mxu0 %v725
        %817 = vmatpush1.msra.mxu0 %v724
        %818 = vmatprep.subr.mxu0 %v729
        %819 = vmatpush1.msra.mxu0 %v728
        %820 = vmatprep.subr.mxu0 %v733
        %821 = vmatpush1.msra.mxu0 %v732
        %822 = vmatprep.mubr.f32.mxu0 %v418
        %823 = vmatmul.mubr.f32.gmra.mrb[0].mxu0 %v417
        %v824 = vpop.f32.mrb[0].mxu0
        %v825 = vadd.f32 %v741, %v824
        %v826 = vpop.f32.mrb[0].mxu0
        %v827 = vadd.f32 %v745, %v826
        %828 = vmatprep.mubr.f32.mxu0 %v420
        %829 = vmatmul.mubr.f32.gmra.mrb[0].mxu0 %v419
        %v830 = vpop.f32.mrb[0].mxu0
        %v831 = vadd.f32 %v741, %v830
        %v832 = vpop.f32.mrb[0].mxu0
        %v833 = vadd.f32 %v745, %v832
        %834 = vmatprep.mubr.f32.mxu0 %v422
        %835 = vmatmul.mubr.f32.gmra.mrb[0].mxu0 %v421
        %v836 = vpop.f32.mrb[0].mxu0
        %v837 = vadd.f32 %v741, %v836
        %v838 = vpop.f32.mrb[0].mxu0
        %v839 = vadd.f32 %v745, %v838
        %840 = vmatprep.mubr.f32.mxu0 %v424
        %841 = vmatmul.mubr.f32.gmra.mrb[0].mxu0 %v423
        %v842 = vpop.f32.mrb[0].mxu0
        %v843 = vadd.f32 %v741, %v842
        %v844 = vpop.f32.mrb[0].mxu0
        %v845 = vadd.f32 %v745, %v844
        %846 = vmatprep.mubr.f32.mxu0 %v426
        %847 = vmatmul.mubr.f32.gmra.mrb[0].mxu0 %v425
        %v848 = vpop.f32.mrb[0].mxu0
        %v849 = vadd.f32 %v741, %v848
        %v850 = vpop.f32.mrb[0].mxu0
        %v851 = vadd.f32 %v745, %v850
        %852 = vmatprep.mubr.f32.mxu0 %v428
        %853 = vmatmul.mubr.f32.gmra.mrb[0].mxu0 %v427
        %v854 = vpop.f32.mrb[0].mxu0
        %v855 = vadd.f32 %v741, %v854
        %v856 = vpop.f32.mrb[0].mxu0
        %v857 = vadd.f32 %v745, %v856
        %858 = vmatprep.mubr.f32.mxu0 %v430
        %859 = vmatmul.mubr.f32.gmra.mrb[0].mxu0 %v429
        %v860 = vpop.f32.mrb[0].mxu0
        %v861 = vadd.f32 %v741, %v860
        %v862 = vpop.f32.mrb[0].mxu0
        %v863 = vadd.f32 %v745, %v862
        %864 = vmatprep.mubr.f32.mxu0 %v432
        %865 = vmatmul.mubr.f32.gmra.mrb[0].mxu0 %v431
        %v866 = vpop.f32.mrb[0].mxu0
        %v867 = vadd.f32 %v741, %v866
        %v868 = vpop.f32.mrb[0].mxu0
        %v869 = vadd.f32 %v745, %v868
        %870 = vmatprep.mubr.f32.mxu0 %v434
        %871 = vmatmul.mubr.f32.gmra.mrb[0].mxu0 %v433
        %v872 = vpop.f32.mrb[0].mxu0
        %v873 = vadd.f32 %v741, %v872
        %v874 = vpop.f32.mrb[0].mxu0
        %v875 = vadd.f32 %v745, %v874
        %876 = vmatprep.mubr.f32.mxu0 %v436
        %877 = vmatmul.mubr.f32.gmra.mrb[0].mxu0 %v435
        %v878 = vpop.f32.mrb[0].mxu0
        %v879 = vadd.f32 %v741, %v878
        %v880 = vpop.f32.mrb[0].mxu0
        %v881 = vadd.f32 %v745, %v880
        %882 = vmatprep.mubr.f32.mxu0 %v438
        %883 = vmatmul.mubr.f32.gmra.mrb[0].mxu0 %v437
        %v884 = vpop.f32.mrb[0].mxu0
        %v885 = vadd.f32 %v741, %v884
        %v886 = vpop.f32.mrb[0].mxu0
        %v887 = vadd.f32 %v745, %v886
        %888 = vmatprep.mubr.f32.mxu0 %v440
        %889 = vmatmul.mubr.f32.gmra.mrb[0].mxu0 %v439
        %v890 = vpop.f32.mrb[0].mxu0
        %v891 = vadd.f32 %v741, %v890
        %v892 = vpop.f32.mrb[0].mxu0
        %v893 = vadd.f32 %v745, %v892
        %894 = vmatprep.mubr.f32.mxu0 %v442
        %895 = vmatmul.mubr.f32.gmra.mrb[0].mxu0 %v441
        %v896 = vpop.f32.mrb[0].mxu0
        %v897 = vadd.f32 %v741, %v896
        %v898 = vpop.f32.mrb[0].mxu0
        %v899 = vadd.f32 %v745, %v898
        %900 = vmatprep.mubr.f32.mxu0 %v444
        %901 = vmatmul.mubr.f32.gmra.mrb[0].mxu0 %v443
        %v902 = vpop.f32.mrb[0].mxu0
        %v903 = vadd.f32 %v741, %v902
        %v904 = vpop.f32.mrb[0].mxu0
        %v905 = vadd.f32 %v745, %v904
        %906 = vmatprep.mubr.f32.mxu0 %v446
        %907 = vmatmul.mubr.f32.gmra.mrb[0].mxu0 %v445
        %v908 = vpop.f32.mrb[0].mxu0
        %v909 = vadd.f32 %v741, %v908
        %v910 = vpop.f32.mrb[0].mxu0
        %v911 = vadd.f32 %v745, %v910
        %912 = vmatprep.mubr.f32.mxu0 %v448
        %913 = vmatmul.mubr.f32.gmra.mrb[0].mxu0 %v447
        %v914 = vpop.f32.mrb[0].mxu0
        %v915 = vadd.f32 %v741, %v914
        %v916 = vpop.f32.mrb[0].mxu0
        %v917 = vadd.f32 %v745, %v916
        %918 = vdwg.mxu0
        %919 = vmatprep.subr.mxu0 %v611
        %920 = vmatpush1.msra.mxu0 %v610
        %921 = vmatprep.subr.mxu0 %v615
        %922 = vmatpush1.msra.mxu0 %v614
        %923 = vmatprep.subr.mxu0 %v619
        %924 = vmatpush1.msra.mxu0 %v618
        %925 = vmatprep.subr.mxu0 %v623
        %926 = vmatpush1.msra.mxu0 %v622
        %927 = vmatprep.subr.mxu0 %v627
        %928 = vmatpush1.msra.mxu0 %v626
        %929 = vmatprep.subr.mxu0 %v631
        %930 = vmatpush1.msra.mxu0 %v630
        %931 = vmatprep.subr.mxu0 %v635
        %932 = vmatpush1.msra.mxu0 %v634
        %933 = vmatprep.subr.mxu0 %v639
        %934 = vmatpush1.msra.mxu0 %v638
        %935 = vmatprep.subr.mxu0 %v643
        %936 = vmatpush1.msra.mxu0 %v642
        %937 = vmatprep.subr.mxu0 %v647
        %938 = vmatpush1.msra.mxu0 %v646
        %939 = vmatprep.subr.mxu0 %v651
        %940 = vmatpush1.msra.mxu0 %v650
        %941 = vmatprep.subr.mxu0 %v655
        %942 = vmatpush1.msra.mxu0 %v654
        %943 = vmatprep.subr.mxu0 %v659
        %944 = vmatpush1.msra.mxu0 %v658
        %945 = vmatprep.subr.mxu0 %v663
        %946 = vmatpush1.msra.mxu0 %v662
        %947 = vmatprep.subr.mxu0 %v667
        %948 = vmatpush1.msra.mxu0 %v666
        %949 = vmatprep.subr.mxu0 %v671
        %950 = vmatpush1.msra.mxu0 %v670
        %951 = vmatprep.subr.mxu0 %v675
        %952 = vmatpush1.msra.mxu0 %v674
        %953 = vmatprep.subr.mxu0 %v679
        %954 = vmatpush1.msra.mxu0 %v678
        %955 = vmatprep.subr.mxu0 %v683
        %956 = vmatpush1.msra.mxu0 %v682
        %957 = vmatprep.subr.mxu0 %v687
        %958 = vmatpush1.msra.mxu0 %v686
        %959 = vmatprep.subr.mxu0 %v691
        %960 = vmatpush1.msra.mxu0 %v690
        %961 = vmatprep.subr.mxu0 %v695
        %962 = vmatpush1.msra.mxu0 %v694
        %963 = vmatprep.subr.mxu0 %v699
        %964 = vmatpush1.msra.mxu0 %v698
        %965 = vmatprep.subr.mxu0 %v703
        %966 = vmatpush1.msra.mxu0 %v702
        %967 = vmatprep.subr.mxu0 %v707
        %968 = vmatpush1.msra.mxu0 %v706
        %969 = vmatprep.subr.mxu0 %v711
        %970 = vmatpush1.msra.mxu0 %v710
        %971 = vmatprep.subr.mxu0 %v715
        %972 = vmatpush1.msra.mxu0 %v714
        %973 = vmatprep.subr.mxu0 %v719
        %974 = vmatpush1.msra.mxu0 %v718
        %975 = vmatprep.subr.mxu0 %v723
        %976 = vmatpush1.msra.mxu0 %v722
        %977 = vmatprep.subr.mxu0 %v727
        %978 = vmatpush1.msra.mxu0 %v726
        %979 = vmatprep.subr.mxu0 %v731
        %980 = vmatpush1.msra.mxu0 %v730
        %981 = vmatprep.subr.mxu0 %v735
        %982 = vmatpush1.msra.mxu0 %v734
        %983 = vmatprep.mubr.f32.mxu0 %v418
        %984 = vmatmul.mubr.f32.gmra.mrb[0].mxu0 %v417
        %v985 = vpop.f32.mrb[0].mxu0
        %v986 = vadd.f32 %v749, %v985
        %v987 = vpop.f32.mrb[0].mxu0
        %v988 = vadd.f32 %v753, %v987
        %989 = vmatprep.mubr.f32.mxu0 %v420
        %990 = vmatmul.mubr.f32.gmra.mrb[0].mxu0 %v419
        %v991 = vpop.f32.mrb[0].mxu0
        %v992 = vadd.f32 %v749, %v991
        %v993 = vpop.f32.mrb[0].mxu0
        %v994 = vadd.f32 %v753, %v993
        %995 = vmatprep.mubr.f32.mxu0 %v422
        %996 = vmatmul.mubr.f32.gmra.mrb[0].mxu0 %v421
        %v997 = vpop.f32.mrb[0].mxu0
        %v998 = vadd.f32 %v749, %v997
        %v999 = vpop.f32.mrb[0].mxu0
        %v1000 = vadd.f32 %v753, %v999
        %1001 = vmatprep.mubr.f32.mxu0 %v424
        %1002 = vmatmul.mubr.f32.gmra.mrb[0].mxu0 %v423
        %v1003 = vpop.f32.mrb[0].mxu0
        %v1004 = vadd.f32 %v749, %v1003
        %v1005 = vpop.f32.mrb[0].mxu0
        %v1006 = vadd.f32 %v753, %v1005
        %1007 = vmatprep.mubr.f32.mxu0 %v426
        %1008 = vmatmul.mubr.f32.gmra.mrb[0].mxu0 %v425
        %v1009 = vpop.f32.mrb[0].mxu0
        %v1010 = vadd.f32 %v749, %v1009
        %v1011 = vpop.f32.mrb[0].mxu0
        %v1012 = vadd.f32 %v753, %v1011
        %1013 = vmatprep.mubr.f32.mxu0 %v428
        %1014 = vmatmul.mubr.f32.gmra.mrb[0].mxu0 %v427
        %v1015 = vpop.f32.mrb[0].mxu0
        %v1016 = vadd.f32 %v749, %v1015
        %v1017 = vpop.f32.mrb[0].mxu0
        %v1018 = vadd.f32 %v753, %v1017
        %1019 = vmatprep.mubr.f32.mxu0 %v430
        %1020 = vmatmul.mubr.f32.gmra.mrb[0].mxu0 %v429
        %v1021 = vpop.f32.mrb[0].mxu0
        %v1022 = vadd.f32 %v749, %v1021
        %v1023 = vpop.f32.mrb[0].mxu0
        %v1024 = vadd.f32 %v753, %v1023
        %1025 = vmatprep.mubr.f32.mxu0 %v432
        %1026 = vmatmul.mubr.f32.gmra.mrb[0].mxu0 %v431
        %v1027 = vpop.f32.mrb[0].mxu0
        %v1028 = vadd.f32 %v749, %v1027
        %v1029 = vpop.f32.mrb[0].mxu0
        %v1030 = vadd.f32 %v753, %v1029
        %1031 = vmatprep.mubr.f32.mxu0 %v434
        %1032 = vmatmul.mubr.f32.gmra.mrb[0].mxu0 %v433
        %v1033 = vpop.f32.mrb[0].mxu0
        %v1034 = vadd.f32 %v749, %v1033
        %v1035 = vpop.f32.mrb[0].mxu0
        %v1036 = vadd.f32 %v753, %v1035
        %1037 = vmatprep.mubr.f32.mxu0 %v436
        %1038 = vmatmul.mubr.f32.gmra.mrb[0].mxu0 %v435
        %v1039 = vpop.f32.mrb[0].mxu0
        %v1040 = vadd.f32 %v749, %v1039
        %v1041 = vpop.f32.mrb[0].mxu0
        %v1042 = vadd.f32 %v753, %v1041
        %1043 = vmatprep.mubr.f32.mxu0 %v438
        %1044 = vmatmul.mubr.f32.gmra.mrb[0].mxu0 %v437
        %v1045 = vpop.f32.mrb[0].mxu0
        %v1046 = vadd.f32 %v749, %v1045
        %v1047 = vpop.f32.mrb[0].mxu0
        %v1048 = vadd.f32 %v753, %v1047
        %1049 = vmatprep.mubr.f32.mxu0 %v440
        %1050 = vmatmul.mubr.f32.gmra.mrb[0].mxu0 %v439
        %v1051 = vpop.f32.mrb[0].mxu0
        %v1052 = vadd.f32 %v749, %v1051
        %v1053 = vpop.f32.mrb[0].mxu0
        %v1054 = vadd.f32 %v753, %v1053
        %1055 = vmatprep.mubr.f32.mxu0 %v442
        %1056 = vmatmul.mubr.f32.gmra.mrb[0].mxu0 %v441
        %v1057 = vpop.f32.mrb[0].mxu0
        %v1058 = vadd.f32 %v749, %v1057
        %v1059 = vpop.f32.mrb[0].mxu0
        %v1060 = vadd.f32 %v753, %v1059
        %1061 = vmatprep.mubr.f32.mxu0 %v444
        %1062 = vmatmul.mubr.f32.gmra.mrb[0].mxu0 %v443
        %v1063 = vpop.f32.mrb[0].mxu0
        %v1064 = vadd.f32 %v749, %v1063
        %v1065 = vpop.f32.mrb[0].mxu0
        %v1066 = vadd.f32 %v753, %v1065
        %1067 = vmatprep.mubr.f32.mxu0 %v446
        %1068 = vmatmul.mubr.f32.gmra.mrb[0].mxu0 %v445
        %v1069 = vpop.f32.mrb[0].mxu0
        %v1070 = vadd.f32 %v749, %v1069
        %v1071 = vpop.f32.mrb[0].mxu0
        %v1072 = vadd.f32 %v753, %v1071
        %1073 = vmatprep.mubr.f32.mxu0 %v448
        %1074 = vmatmul.mubr.f32.gmra.mrb[0].mxu0 %v447
        %v1075 = vpop.f32.mrb[0].mxu0
        %v1076 = vadd.f32 %v749, %v1075
        %v1077 = vpop.f32.mrb[0].mxu0
        %v1078 = vadd.f32 %v753, %v1077
        %1079 = vdwg.mxu0
        %1080 = vmatprep.subr.mxu0 0.0
        %1081 = vmatpush1.xpose.msra.mxu0 %v825
        %1082 = vmatprep.subr.mxu0 0.0
        %1083 = vmatpush1.xpose.msra.mxu0 %v831
        %1084 = vmatprep.subr.mxu0 0.0
        %1085 = vmatpush1.xpose.msra.mxu0 %v837
        %1086 = vmatprep.subr.mxu0 0.0
        %1087 = vmatpush1.xpose.msra.mxu0 %v843
        %1088 = vmatprep.subr.mxu0 0.0
        %1089 = vmatpush1.xpose.msra.mxu0 %v849
        %1090 = vmatprep.subr.mxu0 0.0
        %1091 = vmatpush1.xpose.msra.mxu0 %v855
        %1092 = vmatprep.subr.mxu0 0.0
        %1093 = vmatpush1.xpose.msra.mxu0 %v861
        %1094 = vmatprep.subr.mxu0 0.0
        %1095 = vmatpush1.xpose.msra.mxu0 %v867
        %1096 = vmatprep.subr.mxu0 0.0
        %1097 = vmatpush1.xpose.msra.mxu0 %v873
        %1098 = vmatprep.subr.mxu0 0.0
        %1099 = vmatpush1.xpose.msra.mxu0 %v879
        %1100 = vmatprep.subr.mxu0 0.0
        %1101 = vmatpush1.xpose.msra.mxu0 %v885
        %1102 = vmatprep.subr.mxu0 0.0
        %1103 = vmatpush1.xpose.msra.mxu0 %v891
        %1104 = vmatprep.subr.mxu0 0.0
        %1105 = vmatpush1.xpose.msra.mxu0 %v897
        %1106 = vmatprep.subr.mxu0 0.0
        %1107 = vmatpush1.xpose.msra.mxu0 %v903
        %1108 = vmatprep.subr.mxu0 0.0
        %1109 = vmatpush1.xpose.msra.mxu0 %v909
        %1110 = vmatprep.subr.mxu0 0.0
        %1111 = vmatpush1.xpose.msra.mxu0 %v915
        %1112 = vmatprep.subr.mxu0 0.0
        %1113 = vmatpush1.xpose.msra.mxu0 0.0
        %1114 = vmatprep.subr.mxu0 0.0
        %1115 = vmatpush1.xpose.msra.mxu0 0.0
        %1116 = vmatprep.subr.mxu0 0.0
        %1117 = vmatpush1.xpose.msra.mxu0 0.0
        %1118 = vmatprep.subr.mxu0 0.0
        %1119 = vmatpush1.xpose.msra.mxu0 0.0
        %1120 = vmatprep.subr.mxu0 0.0
        %1121 = vmatpush1.xpose.msra.mxu0 0.0
        %1122 = vmatprep.subr.mxu0 0.0
        %1123 = vmatpush1.xpose.msra.mxu0 0.0
        %1124 = vmatprep.subr.mxu0 0.0
        %1125 = vmatpush1.xpose.msra.mxu0 0.0
        %1126 = vmatprep.subr.mxu0 0.0
        %1127 = vmatpush1.xpose.msra.mxu0 0.0
        %1128 = vmatprep.subr.mxu0 0.0
        %1129 = vmatpush1.xpose.msra.mxu0 0.0
        %1130 = vmatprep.subr.mxu0 0.0
        %1131 = vmatpush1.xpose.msra.mxu0 0.0
        %1132 = vmatprep.subr.mxu0 0.0
        %1133 = vmatpush1.xpose.msra.mxu0 0.0
        %1134 = vmatprep.subr.mxu0 0.0
        %1135 = vmatpush1.xpose.msra.mxu0 0.0
        %1136 = vmatprep.subr.mxu0 0.0
        %1137 = vmatpush1.xpose.msra.mxu0 0.0
        %1138 = vmatprep.subr.mxu0 0.0
        %1139 = vmatpush1.xpose.msra.mxu0 0.0
        %1140 = vmatprep.subr.mxu0 0.0
        %1141 = vmatpush1.xpose.msra.mxu0 0.0
        %1142 = vmatprep.subr.mxu0 0.0
        %1143 = vmatpush1.xpose.msra.mxu0 0.0
        %1144 = vmatprep.mubr.f32.mxu0 0.0
        %1145 = vmatmul.mubr.f32.gmra.mrb[0].mxu0 %v604
        %v1146 = vpop.f32.mrb[0].mxu0
        %v1147 = vadd.f32 0.0, %v1146
        %v1148 = vpop.f32.mrb[0].mxu0
        %1149 = vdwg.mxu0
        %v1150 = vmul.f32 %v1147, 0.088388346
        %vm1151 = vcmask 1040384
        %v1152 = vsel %vm1151, %v1150, -inf
        %1153 = vmax.xlane.f32.xlu0 %v1152
        %v1154 = vpop.xlane.xlu0 %1153
        %v1155 = vsub.f32 %v1150, %v1154
        %v1156 = vmul.f32 %v1155, 1.442695
        %v1157 = vpow.pop %v1156
        %v1158 = vsel %vm1151, %v1157, 0.0
        %1159 = vadd.xlane.f32.xlu0 %v1158
        %v1160 = vpop.xlane.xlu0 %1159
        %v1161 = vrcp.pop %v1160
        %v1162 = vmul.f32 %v1157, %v1161
        %1163 = vmatprep.subr.mxu0 0.0
        %1164 = vmatpush1.msra.mxu0 %v986
        %1165 = vmatprep.subr.mxu0 0.0
        %1166 = vmatpush1.msra.mxu0 %v992
        %1167 = vmatprep.subr.mxu0 0.0
        %1168 = vmatpush1.msra.mxu0 %v998
        %1169 = vmatprep.subr.mxu0 0.0
        %1170 = vmatpush1.msra.mxu0 %v1004
        %1171 = vmatprep.subr.mxu0 0.0
        %1172 = vmatpush1.msra.mxu0 %v1010
        %1173 = vmatprep.subr.mxu0 0.0
        %1174 = vmatpush1.msra.mxu0 %v1016
        %1175 = vmatprep.subr.mxu0 0.0
        %1176 = vmatpush1.msra.mxu0 %v1022
        %1177 = vmatprep.subr.mxu0 0.0
        %1178 = vmatpush1.msra.mxu0 %v1028
        %1179 = vmatprep.subr.mxu0 0.0
        %1180 = vmatpush1.msra.mxu0 %v1034
        %1181 = vmatprep.subr.mxu0 0.0
        %1182 = vmatpush1.msra.mxu0 %v1040
        %1183 = vmatprep.subr.mxu0 0.0
        %1184 = vmatpush1.msra.mxu0 %v1046
        %1185 = vmatprep.subr.mxu0 0.0
        %1186 = vmatpush1.msra.mxu0 %v1052
        %1187 = vmatprep.subr.mxu0 0.0
        %1188 = vmatpush1.msra.mxu0 %v1058
        %1189 = vmatprep.subr.mxu0 0.0
        %1190 = vmatpush1.msra.mxu0 %v1064
        %1191 = vmatprep.subr.mxu0 0.0
        %1192 = vmatpush1.msra.mxu0 %v1070
        %1193 = vmatprep.subr.mxu0 0.0
        %1194 = vmatpush1.msra.mxu0 %v1076
        %1195 = vmatprep.subr.mxu0 0.0
        %1196 = vmatpush1.msra.mxu0 0.0
        %1197 = vmatprep.subr.mxu0 0.0
        %1198 = vmatpush1.msra.mxu0 0.0
        %1199 = vmatprep.subr.mxu0 0.0
        %1200 = vmatpush1.msra.mxu0 0.0
        %1201 = vmatprep.subr.mxu0 0.0
        %1202 = vmatpush1.msra.mxu0 0.0
        %1203 = vmatprep.subr.mxu0 0.0
        %1204 = vmatpush1.msra.mxu0 0.0
        %1205 = vmatprep.subr.mxu0 0.0
        %1206 = vmatpush1.msra.mxu0 0.0
        %1207 = vmatprep.subr.mxu0 0.0
        %1208 = vmatpush1.msra.mxu0 0.0
        %1209 = vmatprep.subr.mxu0 0.0
        %1210 = vmatpush1.msra.mxu0 0.0
        %1211 = vmatprep.subr.mxu0 0.0
        %1212 = vmatpush1.msra.mxu0 0.0
        %1213 = vmatprep.subr.mxu0 0.0
        %1214 = vmatpush1.msra.mxu0 0.0
        %1215 = vmatprep.subr.mxu0 0.0
        %1216 = vmatpush1.msra.mxu0 0.0
        %1217 = vmatprep.subr.mxu0 0.0
        %1218 = vmatpush1.msra.mxu0 0.0
        %1219 = vmatprep.subr.mxu0 0.0
        %1220 = vmatpush1.msra.mxu0 0.0
        %1221 = vmatprep.subr.mxu0 0.0
        %1222 = vmatpush1.msra.mxu0 0.0
        %1223 = vmatprep.subr.mxu0 0.0
        %1224 = vmatpush1.msra.mxu0 0.0
        %1225 = vmatprep.subr.mxu0 0.0
        %1226 = vmatpush1.msra.mxu0 0.0
        %1227 = vmatprep.mubr.f32.mxu0 0.0
        %1228 = vmatmul.mubr.f32.gmra.mrb[0].mxu0 %v1162
        %v1229 = vpop.f32.mrb[0].mxu0
        %v1230 = vadd.f32 0.0, %v1229
        %v1231 = vpop.f32.mrb[0].mxu0
        %1232 = vdwg.mxu0
        %1233 = vmatprep.subr.mxu0 0.0
        %1234 = vmatpush1.xpose.msra.mxu0 %v827
        %1235 = vmatprep.subr.mxu0 0.0
        %1236 = vmatpush1.xpose.msra.mxu0 %v833
        %1237 = vmatprep.subr.mxu0 0.0
        %1238 = vmatpush1.xpose.msra.mxu0 %v839
        %1239 = vmatprep.subr.mxu0 0.0
        %1240 = vmatpush1.xpose.msra.mxu0 %v845
        %1241 = vmatprep.subr.mxu0 0.0
        %1242 = vmatpush1.xpose.msra.mxu0 %v851
        %1243 = vmatprep.subr.mxu0 0.0
        %1244 = vmatpush1.xpose.msra.mxu0 %v857
        %1245 = vmatprep.subr.mxu0 0.0
        %1246 = vmatpush1.xpose.msra.mxu0 %v863
        %1247 = vmatprep.subr.mxu0 0.0
        %1248 = vmatpush1.xpose.msra.mxu0 %v869
        %1249 = vmatprep.subr.mxu0 0.0
        %1250 = vmatpush1.xpose.msra.mxu0 %v875
        %1251 = vmatprep.subr.mxu0 0.0
        %1252 = vmatpush1.xpose.msra.mxu0 %v881
        %1253 = vmatprep.subr.mxu0 0.0
        %1254 = vmatpush1.xpose.msra.mxu0 %v887
        %1255 = vmatprep.subr.mxu0 0.0
        %1256 = vmatpush1.xpose.msra.mxu0 %v893
        %1257 = vmatprep.subr.mxu0 0.0
        %1258 = vmatpush1.xpose.msra.mxu0 %v899
        %1259 = vmatprep.subr.mxu0 0.0
        %1260 = vmatpush1.xpose.msra.mxu0 %v905
        %1261 = vmatprep.subr.mxu0 0.0
        %1262 = vmatpush1.xpose.msra.mxu0 %v911
        %1263 = vmatprep.subr.mxu0 0.0
        %1264 = vmatpush1.xpose.msra.mxu0 %v917
        %1265 = vmatprep.subr.mxu0 0.0
        %1266 = vmatpush1.xpose.msra.mxu0 0.0
        %1267 = vmatprep.subr.mxu0 0.0
        %1268 = vmatpush1.xpose.msra.mxu0 0.0
        %1269 = vmatprep.subr.mxu0 0.0
        %1270 = vmatpush1.xpose.msra.mxu0 0.0
        %1271 = vmatprep.subr.mxu0 0.0
        %1272 = vmatpush1.xpose.msra.mxu0 0.0
        %1273 = vmatprep.subr.mxu0 0.0
        %1274 = vmatpush1.xpose.msra.mxu0 0.0
        %1275 = vmatprep.subr.mxu0 0.0
        %1276 = vmatpush1.xpose.msra.mxu0 0.0
        %1277 = vmatprep.subr.mxu0 0.0
        %1278 = vmatpush1.xpose.msra.mxu0 0.0
        %1279 = vmatprep.subr.mxu0 0.0
        %1280 = vmatpush1.xpose.msra.mxu0 0.0
        %1281 = vmatprep.subr.mxu0 0.0
        %1282 = vmatpush1.xpose.msra.mxu0 0.0
        %1283 = vmatprep.subr.mxu0 0.0
        %1284 = vmatpush1.xpose.msra.mxu0 0.0
        %1285 = vmatprep.subr.mxu0 0.0
        %1286 = vmatpush1.xpose.msra.mxu0 0.0
        %1287 = vmatprep.subr.mxu0 0.0
        %1288 = vmatpush1.xpose.msra.mxu0 0.0
        %1289 = vmatprep.subr.mxu0 0.0
        %1290 = vmatpush1.xpose.msra.mxu0 0.0
        %1291 = vmatprep.subr.mxu0 0.0
        %1292 = vmatpush1.xpose.msra.mxu0 0.0
        %1293 = vmatprep.subr.mxu0 0.0
        %1294 = vmatpush1.xpose.msra.mxu0 0.0
        %1295 = vmatprep.subr.mxu0 0.0
        %1296 = vmatpush1.xpose.msra.mxu0 0.0
        %1297 = vmatprep.mubr.f32.mxu0 0.0
        %1298 = vmatmul.mubr.f32.gmra.mrb[0].mxu0 %v606
        %v1299 = vpop.f32.mrb[0].mxu0
        %v1300 = vadd.f32 0.0, %v1299
        %v1301 = vpop.f32.mrb[0].mxu0
        %1302 = vdwg.mxu0
        %v1303 = vmul.f32 %v1300, 0.088388346
        %v1304 = vsel %vm1151, %v1303, -inf
        %1305 = vmax.xlane.f32.xlu0 %v1304
        %v1306 = vpop.xlane.xlu0 %1305
        %v1307 = vsub.f32 %v1303, %v1306
        %v1308 = vmul.f32 %v1307, 1.442695
        %v1309 = vpow.pop %v1308
        %v1310 = vsel %vm1151, %v1309, 0.0
        %1311 = vadd.xlane.f32.xlu0 %v1310
        %v1312 = vpop.xlane.xlu0 %1311
        %v1313 = vrcp.pop %v1312
        %v1314 = vmul.f32 %v1309, %v1313
        %1315 = vmatprep.subr.mxu0 0.0
        %1316 = vmatpush1.msra.mxu0 %v988
        %1317 = vmatprep.subr.mxu0 0.0
        %1318 = vmatpush1.msra.mxu0 %v994
        %1319 = vmatprep.subr.mxu0 0.0
        %1320 = vmatpush1.msra.mxu0 %v1000
        %1321 = vmatprep.subr.mxu0 0.0
        %1322 = vmatpush1.msra.mxu0 %v1006
        %1323 = vmatprep.subr.mxu0 0.0
        %1324 = vmatpush1.msra.mxu0 %v1012
        %1325 = vmatprep.subr.mxu0 0.0
        %1326 = vmatpush1.msra.mxu0 %v1018
        %1327 = vmatprep.subr.mxu0 0.0
        %1328 = vmatpush1.msra.mxu0 %v1024
        %1329 = vmatprep.subr.mxu0 0.0
        %1330 = vmatpush1.msra.mxu0 %v1030
        %1331 = vmatprep.subr.mxu0 0.0
        %1332 = vmatpush1.msra.mxu0 %v1036
        %1333 = vmatprep.subr.mxu0 0.0
        %1334 = vmatpush1.msra.mxu0 %v1042
        %1335 = vmatprep.subr.mxu0 0.0
        %1336 = vmatpush1.msra.mxu0 %v1048
        %1337 = vmatprep.subr.mxu0 0.0
        %1338 = vmatpush1.msra.mxu0 %v1054
        %1339 = vmatprep.subr.mxu0 0.0
        %1340 = vmatpush1.msra.mxu0 %v1060
        %1341 = vmatprep.subr.mxu0 0.0
        %1342 = vmatpush1.msra.mxu0 %v1066
        %1343 = vmatprep.subr.mxu0 0.0
        %1344 = vmatpush1.msra.mxu0 %v1072
        %1345 = vmatprep.subr.mxu0 0.0
        %1346 = vmatpush1.msra.mxu0 %v1078
        %1347 = vmatprep.subr.mxu0 0.0
        %1348 = vmatpush1.msra.mxu0 0.0
        %1349 = vmatprep.subr.mxu0 0.0
        %1350 = vmatpush1.msra.mxu0 0.0
        %1351 = vmatprep.subr.mxu0 0.0
        %1352 = vmatpush1.msra.mxu0 0.0
        %1353 = vmatprep.subr.mxu0 0.0
        %1354 = vmatpush1.msra.mxu0 0.0
        %1355 = vmatprep.subr.mxu0 0.0
        %1356 = vmatpush1.msra.mxu0 0.0
        %1357 = vmatprep.subr.mxu0 0.0
        %1358 = vmatpush1.msra.mxu0 0.0
        %1359 = vmatprep.subr.mxu0 0.0
        %1360 = vmatpush1.msra.mxu0 0.0
        %1361 = vmatprep.subr.mxu0 0.0
        %1362 = vmatpush1.msra.mxu0 0.0
        %1363 = vmatprep.subr.mxu0 0.0
        %1364 = vmatpush1.msra.mxu0 0.0
        %1365 = vmatprep.subr.mxu0 0.0
        %1366 = vmatpush1.msra.mxu0 0.0
        %1367 = vmatprep.subr.mxu0 0.0
        %1368 = vmatpush1.msra.mxu0 0.0
        %1369 = vmatprep.subr.mxu0 0.0
        %1370 = vmatpush1.msra.mxu0 0.0
        %1371 = vmatprep.subr.mxu0 0.0
        %1372 = vmatpush1.msra.mxu0 0.0
        %1373 = vmatprep.subr.mxu0 0.0
        %1374 = vmatpush1.msra.mxu0 0.0
        %1375 = vmatprep.subr.mxu0 0.0
        %1376 = vmatpush1.msra.mxu0 0.0
        %1377 = vmatprep.subr.mxu0 0.0
        %1378 = vmatpush1.msra.mxu0 0.0
        %1379 = vmatprep.mubr.f32.mxu0 0.0
        %1380 = vmatmul.mubr.f32.gmra.mrb[0].mxu0 %v1314
        %v1381 = vpop.f32.mrb[0].mxu0
        %v1382 = vadd.f32 0.0, %v1381
        %v1383 = vpop.f32.mrb[0].mxu0
        %1384 = vdwg.mxu0
        %v1385 = vld [vmem:[#allocation10] sm:$0xff]
        %v1386 = vld [vmem:[#allocation10 + $0x8] sm:$0xff]
        %v1387 = vld [vmem:[#allocation10 + $0x10] sm:$0xff]
        %v1388 = vld [vmem:[#allocation10 + $0x18] sm:$0xff]
        %v1389 = vld [vmem:[#allocation10 + $0x20] sm:$0xff]
        %v1390 = vld [vmem:[#allocation10 + $0x28] sm:$0xff]
        %v1391 = vld [vmem:[#allocation10 + $0x30] sm:$0xff]
        %v1392 = vld [vmem:[#allocation10 + $0x38] sm:$0xff]
        %v1393 = vld [vmem:[#allocation10 + $0x40] sm:$0xff]
        %v1394 = vld [vmem:[#allocation10 + $0x48] sm:$0xff]
        %v1395 = vld [vmem:[#allocation10 + $0x50] sm:$0xff]
        %v1396 = vld [vmem:[#allocation10 + $0x58] sm:$0xff]
        %v1397 = vld [vmem:[#allocation10 + $0x60] sm:$0xff]
        %v1398 = vld [vmem:[#allocation10 + $0x68] sm:$0xff]
        %v1399 = vld [vmem:[#allocation10 + $0x70] sm:$0xff]
        %v1400 = vld [vmem:[#allocation10 + $0x78] sm:$0xff]
        %v1401 = vld [vmem:[#allocation10 + $0x80] sm:$0xff]
        %v1402 = vld [vmem:[#allocation10 + $0x88] sm:$0xff]
        %v1403 = vld [vmem:[#allocation10 + $0x90] sm:$0xff]
        %v1404 = vld [vmem:[#allocation10 + $0x98] sm:$0xff]
        %v1405 = vld [vmem:[#allocation10 + $0xa0] sm:$0xff]
        %v1406 = vld [vmem:[#allocation10 + $0xa8] sm:$0xff]
        %v1407 = vld [vmem:[#allocation10 + $0xb0] sm:$0xff]
        %v1408 = vld [vmem:[#allocation10 + $0xb8] sm:$0xff]
        %v1409 = vld [vmem:[#allocation10 + $0xc0] sm:$0xff]
        %v1410 = vld [vmem:[#allocation10 + $0xc8] sm:$0xff]
        %v1411 = vld [vmem:[#allocation10 + $0xd0] sm:$0xff]
        %v1412 = vld [vmem:[#allocation10 + $0xd8] sm:$0xff]
        %v1413 = vld [vmem:[#allocation10 + $0xe0] sm:$0xff]
        %v1414 = vld [vmem:[#allocation10 + $0xe8] sm:$0xff]
        %v1415 = vld [vmem:[#allocation10 + $0xf0] sm:$0xff]
        %v1416 = vld [vmem:[#allocation10 + $0xf8] sm:$0xff]
        %v1417 = vld [vmem:[#allocation10 + $0x100] sm:$0xff]
        %v1418 = vld [vmem:[#allocation10 + $0x108] sm:$0xff]
        %v1419 = vld [vmem:[#allocation10 + $0x110] sm:$0xff]
        %v1420 = vld [vmem:[#allocation10 + $0x118] sm:$0xff]
        %v1421 = vld [vmem:[#allocation10 + $0x120] sm:$0xff]
        %v1422 = vld [vmem:[#allocation10 + $0x128] sm:$0xff]
        %v1423 = vld [vmem:[#allocation10 + $0x130] sm:$0xff]
        %v1424 = vld [vmem:[#allocation10 + $0x138] sm:$0xff]
        %v1425 = vld [vmem:[#allocation10 + $0x140] sm:$0xff]
        %v1426 = vld [vmem:[#allocation10 + $0x148] sm:$0xff]
        %v1427 = vld [vmem:[#allocation10 + $0x150] sm:$0xff]
        %v1428 = vld [vmem:[#allocation10 + $0x158] sm:$0xff]
        %v1429 = vld [vmem:[#allocation10 + $0x160] sm:$0xff]
        %v1430 = vld [vmem:[#allocation10 + $0x168] sm:$0xff]
        %v1431 = vld [vmem:[#allocation10 + $0x170] sm:$0xff]
        %v1432 = vld [vmem:[#allocation10 + $0x178] sm:$0xff]
        %v1433 = vld [vmem:[#allocation10 + $0x180] sm:$0xff]
        %v1434 = vld [vmem:[#allocation10 + $0x188] sm:$0xff]
        %v1435 = vld [vmem:[#allocation10 + $0x190] sm:$0xff]
        %v1436 = vld [vmem:[#allocation10 + $0x198] sm:$0xff]
        %v1437 = vld [vmem:[#allocation10 + $0x1a0] sm:$0xff]
        %v1438 = vld [vmem:[#allocation10 + $0x1a8] sm:$0xff]
        %v1439 = vld [vmem:[#allocation10 + $0x1b0] sm:$0xff]
        %v1440 = vld [vmem:[#allocation10 + $0x1b8] sm:$0xff]
        %v1441 = vld [vmem:[#allocation10 + $0x1c0] sm:$0xff]
        %v1442 = vld [vmem:[#allocation10 + $0x1c8] sm:$0xff]
        %v1443 = vld [vmem:[#allocation10 + $0x1d0] sm:$0xff]
        %v1444 = vld [vmem:[#allocation10 + $0x1d8] sm:$0xff]
        %v1445 = vld [vmem:[#allocation10 + $0x1e0] sm:$0xff]
        %v1446 = vld [vmem:[#allocation10 + $0x1e8] sm:$0xff]
        %v1447 = vld [vmem:[#allocation10 + $0x1f0] sm:$0xff]
        %v1448 = vld [vmem:[#allocation10 + $0x1f8] sm:$0xff]
        %v1449 = vld [vmem:[%s7] sm:$0x3]
        %v1451 = vlaneseq
        %v1452 = vshrl.u32 %v1451, 7
        %v1453 = vsub.s32 0, %v1452
        %v1454 = vrot.slane %v1449, %v1453
        %v1455 = vlaneseq
        %v1456 = vshrl.u32 %v1455, 7
        %v1457 = vsub.s32 1, %v1456
        %v1458 = vrot.slane %v1449, %v1457
        %1461 = vmatprep.subr.mxu0 %v1386
        %1462 = vmatpush1.msra.mxu0 %v1385
        %1463 = vmatprep.subr.mxu0 %v1388
        %1464 = vmatpush1.msra.mxu0 %v1387
        %1465 = vmatprep.subr.mxu0 %v1390
        %1466 = vmatpush1.msra.mxu0 %v1389
        %1467 = vmatprep.subr.mxu0 %v1392
        %1468 = vmatpush1.msra.mxu0 %v1391
        %1469 = vmatprep.subr.mxu0 %v1394
        %1470 = vmatpush1.msra.mxu0 %v1393
        %1471 = vmatprep.subr.mxu0 %v1396
        %1472 = vmatpush1.msra.mxu0 %v1395
        %1473 = vmatprep.subr.mxu0 %v1398
        %1474 = vmatpush1.msra.mxu0 %v1397
        %1475 = vmatprep.subr.mxu0 %v1400
        %1476 = vmatpush1.msra.mxu0 %v1399
        %1477 = vmatprep.subr.mxu0 %v1402
        %1478 = vmatpush1.msra.mxu0 %v1401
        %1479 = vmatprep.subr.mxu0 %v1404
        %1480 = vmatpush1.msra.mxu0 %v1403
        %1481 = vmatprep.subr.mxu0 %v1406
        %1482 = vmatpush1.msra.mxu0 %v1405
        %1483 = vmatprep.subr.mxu0 %v1408
        %1484 = vmatpush1.msra.mxu0 %v1407
        %1485 = vmatprep.subr.mxu0 %v1410
        %1486 = vmatpush1.msra.mxu0 %v1409
        %1487 = vmatprep.subr.mxu0 %v1412
        %1488 = vmatpush1.msra.mxu0 %v1411
        %1489 = vmatprep.subr.mxu0 %v1414
        %1490 = vmatpush1.msra.mxu0 %v1413
        %1491 = vmatprep.subr.mxu0 %v1416
        %1492 = vmatpush1.msra.mxu0 %v1415
        %1493 = vmatprep.subr.mxu0 %v1418
        %1494 = vmatpush1.msra.mxu0 %v1417
        %1495 = vmatprep.subr.mxu0 %v1420
        %1496 = vmatpush1.msra.mxu0 %v1419
        %1497 = vmatprep.subr.mxu0 %v1422
        %1498 = vmatpush1.msra.mxu0 %v1421
        %1499 = vmatprep.subr.mxu0 %v1424
        %1500 = vmatpush1.msra.mxu0 %v1423
        %1501 = vmatprep.subr.mxu0 %v1426
        %1502 = vmatpush1.msra.mxu0 %v1425
        %1503 = vmatprep.subr.mxu0 %v1428
        %1504 = vmatpush1.msra.mxu0 %v1427
        %1505 = vmatprep.subr.mxu0 %v1430
        %1506 = vmatpush1.msra.mxu0 %v1429
        %1507 = vmatprep.subr.mxu0 %v1432
        %1508 = vmatpush1.msra.mxu0 %v1431
        %1509 = vmatprep.subr.mxu0 %v1434
        %1510 = vmatpush1.msra.mxu0 %v1433
        %1511 = vmatprep.subr.mxu0 %v1436
        %1512 = vmatpush1.msra.mxu0 %v1435
        %1513 = vmatprep.subr.mxu0 %v1438
        %1514 = vmatpush1.msra.mxu0 %v1437
        %1515 = vmatprep.subr.mxu0 %v1440
        %1516 = vmatpush1.msra.mxu0 %v1439
        %1517 = vmatprep.subr.mxu0 %v1442
        %1518 = vmatpush1.msra.mxu0 %v1441
        %1519 = vmatprep.subr.mxu0 %v1444
        %1520 = vmatpush1.msra.mxu0 %v1443
        %1521 = vmatprep.subr.mxu0 %v1446
        %1522 = vmatpush1.msra.mxu0 %v1445
        %1523 = vmatprep.subr.mxu0 %v1448
        %1524 = vmatpush1.msra.mxu0 %v1447
        %1525 = vmatprep.mubr.f32.mxu0 %v1382
        %1526 = vmatmul.mubr.f32.gmra.mrb[0].mxu0 %v1230
        %v1527 = vpop.f32.mrb[0].mxu0
        %v1528 = vadd.f32 %v1454, %v1527
        %v1529 = vpop.f32.mrb[0].mxu0
        %v1530 = vadd.f32 %v1458, %v1529
        %1531 = vdwg.mxu0
        %v1532 = vadd.f32 %v1162, %v1314
        %v1533 = vmul.f32 %v1532, 0.5
        %v1536 = vcombine.low %v1528, %v1530
        %v1538 = vunpack.c.l.s4 1966171168
        %v1539 = vunpack.c.0.s8 %v1538
        %v1540 = vlaneseq
        %v1541 = vshrl.u32 %v1540, 7
        %v1542 = vsub.s32 %v1539, %v1541
        %v1543 = vrot.slane %v1536, %v1542
        %v1545 = vunpack.c.l.s4 1966171168
        %v1546 = vunpack.c.0.s8 %v1545
        %v1547 = vlaneseq
        %v1548 = vshrl.u32 %v1547, 7
        %v1549 = vsub.s32 %v1546, %v1548
        %v1550 = vrot.slane %v1543, %v1549
        %v1552 = vlaneseq
        %vm1553 = vcmp.ge.s32.totalorder %v1552, 0
        %vm1554 = vcmp.lt.s32.totalorder %v1552, 256
        %vm1555 = vmand %vm1553, %vm1554
        %1556 = vst.msk [vmem:[%s410] sm:$0x3] %vm1555, %v1550
        %1557 = vst [vmem:[%s416] sm:$0x1] %v1533
        %s1558 = sand.u32 %s213, 1
        %s1559 = scalar_lea.sflag [#allocation4], %s1558
        %s1560 = sand.u32 %s213, 1
        %s1561 = smul.addr %s1560, 2
        %s1562 = scalar_lea.vmem [#allocation11], %s1561
        %s1563 = sand.u32 %s239, 1
        %s1564 = scalar_lea.sflag [#allocation13], %s1563
        %s1565 = sand.u32 %s239, 1
        %s1566 = scalar_lea.vmem [#allocation12], %s1565
        // Predicated region
        $region73: #{imu_encoder.1} parent=51 // pred_check
          %p1567 = pneg %p223
        $region74: #{imu_encoder.1} parent=51 // pred_check_branch
          %1569 = sbr.rel (%p1567) target = $region76
        $region75: #{imu_encoder.1} parent=51 // pred_region
          %s1571 = ssub.s32 32, 32
          %1572 = vsyncadd %s1559, %s1571
          %s1573 = smul.addr %s32, 2
          %s1574 = smul.addr %s1573, 16
          %s1575 = scalar_lea.hbm %s8, %s1574
          %s1577 = sshll.u32 %s1562, 4
          %s1578 = int_to_ptr.vmem [resolvable:$true] %s1577
          %1580 = dma.vmem_to_hbm [thread:$0]  %s1578, 32, %s1575, %s1559
        $region76: #{imu_encoder.1} parent=51 // pred_fallthru
          _
        // Predicated region
        $region77: #{imu_encoder.1} parent=51 // pred_check
          %p1581 = pneg %p249
        $region78: #{imu_encoder.1} parent=51 // pred_check_branch
          %1583 = sbr.rel (%p1581) target = $region80
        $region79: #{imu_encoder.1} parent=51 // pred_region
          %s1585 = ssub.s32 16, 16
          %1586 = vsyncadd %s1564, %s1585
          %s1587 = smul.addr %s32, 16
          %s1588 = scalar_lea.hbm %s9, %s1587
          %s1590 = sshll.u32 %s1566, 4
          %s1591 = int_to_ptr.vmem [resolvable:$true] %s1590
          %1593 = dma.vmem_to_hbm [thread:$0]  %s1591, 16, %s1588, %s1564
        $region80: #{imu_encoder.1} parent=51 // pred_fallthru
          _
      $region52: #{imu_encoder.1} parent=5 // pred_fallthru
        _
      %p1594 = scmp.le.s32.totalorder 2, %s27
      // Predicated region
      $region81: #{imu_encoder.1} parent=5 // pred_check
        %p1595 = pneg %p1594
      $region82: #{imu_encoder.1} parent=5 // pred_check_branch
        %1597 = sbr.rel (%p1595) target = $region84
      $region83: #{imu_encoder.1} parent=5 // pred_region
        %s1598 = ssub.s32 %s27, 2
        // Predicated region
        $region85: #{imu_encoder.1} parent=83 // pred_check
          %p1599 = pneg %p229
        $region86: #{imu_encoder.1} parent=83 // pred_check_branch
          %1601 = sbr.rel (%p1599) target = $region88
        $region87: #{imu_encoder.1} parent=83 // pred_region
          %s1602 = sand.u32 %s214, 1
          %s1603 = scalar_lea.sflag [#allocation4], %s1602
          %s1604 = sand.u32 %s214, 1
          %s1605 = smul.addr %s1604, 2
          %s1606 = scalar_lea.vmem [#allocation11], %s1605
          %1607 = dma.done %s1603, 32
        $region88: #{imu_encoder.1} parent=83 // pred_fallthru
          _
        // Predicated region
        $region89: #{imu_encoder.1} parent=83 // pred_check
          %p1608 = pneg %p255
        $region90: #{imu_encoder.1} parent=83 // pred_check_branch
          %1610 = sbr.rel (%p1608) target = $region92
        $region91: #{imu_encoder.1} parent=83 // pred_region
          %s1611 = sand.u32 %s240, 1
          %s1612 = scalar_lea.sflag [#allocation13], %s1611
          %s1613 = sand.u32 %s240, 1
          %s1614 = scalar_lea.vmem [#allocation12], %s1613
          %1615 = dma.done %s1612, 16
        $region92: #{imu_encoder.1} parent=83 // pred_fallthru
          _
      $region84: #{imu_encoder.1} parent=5 // pred_fallthru
        _
    $region6: #{imu_encoder.1} parent=1 // loop_footer
      %s31 = sadd.s32 1, %s27
    $region7: #{imu_encoder.1} parent=1 // loop_footer_branch
      %26 = sbr.rel target = $region3
    $region8: #{imu_encoder.1} parent=1 // loop_exit
      _
    %1616 = vsyncpa [#allocation3], 1
    %s1617 = scalar_lea.sflag [#allocation3], 1
    %1618 = vsyncpa %s1617, 1
    %1619 = vsyncpa [#allocation6], 1
    %1620 = vsyncpa [#allocation9], 1
    %1621 = vsyncpa [#allocation4], 1
    %s1622 = scalar_lea.sflag [#allocation4], 1
    %1623 = vsyncpa %s1622, 1
    %1624 = vsyncpa [#allocation13], 1
    %s1625 = scalar_lea.sflag [#allocation13], 1
    %1626 = vsyncpa %s1625, 1

</llo_original>
